<compile_context>
chip_gen: v5e
topology: v5e:2x2
jax: 0.10.0
libtpu: 0.0.40
codegen_flags: <defaults>
</compile_context>

<pallas_src>
import functools
import math

import jax
import jax.numpy as jnp
from jax.experimental import pallas as pl
from jax.experimental.pallas import tpu as pltpu


_PER_LAYER_KEYS = ("ln1_w", "ln1_b", "wqkv_t", "bqkv", "wo_t", "bo",
                   "ln2_w", "ln2_b", "w1_t", "b1", "w2_t", "b2")
_INVARIANT_KEYS = ("emb", "pos", "dec_w_t", "dec_b")


# ----------------------------- kernel ---------------------------------------


def _layer_norm(x, w, b, eps=1e-5):
    mu = jnp.mean(x, axis=-1, keepdims=True)
    var = jnp.mean((x - mu) ** 2, axis=-1, keepdims=True)
    return (x - mu) * jax.lax.rsqrt(var + eps) * w + b


def fused_lm_kernel(tok_ref, emb_ref, pos_ref,
                    ln1w_ref, ln1b_ref, wqkv_ref, bqkv_ref, wo_ref, bo_ref,
                    ln2w_ref, ln2b_ref, w1_ref, b1_ref, w2_ref, b2_ref,
                    decw_ref, decb_ref, o_ref, x_ref, mask_ref,
                    *, num_heads, seq_len, batch_block):
    """One encoder layer (grid axis 1) for one batch block (grid axis 0)."""
    l = pl.program_id(1)
    S, BB, H = seq_len, batch_block, num_heads
    M = BB * S
    D = pos_ref.shape[-1]
    hd = D // H
    bf16 = jnp.bfloat16

    # ---------------- layer-0 prologue (runs once per batch block) -----------
    @pl.when(l == 0)
    def _():
        # Byte embedding of the pre-shifted tokens as a one-hot matmul.
        # The -1 sentinel row gives an all-zero one-hot -> exact zero embedding
        # row, matching the reference's zeros-prepend shift-right.
        tok = tok_ref[0]                                             # (M, 1) int32
        vocab = jax.lax.broadcasted_iota(jnp.int32, (M, 256), 1)
        one_hot = (vocab == tok).astype(bf16)                        # exact 0/1 in bf16
        x0 = jnp.dot(one_hot, emb_ref[...],
                     preferred_element_type=jnp.float32)             # (M, D) f32
        pos = pos_ref[...]
        if BB > 1:
            pos = jnp.tile(pos, (BB, 1))
        x0 = x0 + pos
        # TODO(synk): F.dropout(p=cfg.dropout) RNG not reproduced; cfg.dropout
        # == 0.0 so dropout is the identity here (eval-mode semantics).
        x_ref[...] = x0
        # causal additive mask, built once and reused by every layer
        row = jax.lax.broadcasted_iota(jnp.int32, (S, S), 0)
        col = jax.lax.broadcasted_iota(jnp.int32, (S, S), 1)
        mask_ref[...] = jnp.where(col > row, jnp.float32(-1e30), jnp.float32(0.0))

    x = x_ref[...]                                                   # (M, D) f32
    neg = mask_ref[...]                                              # (S, S) f32

    # ---------------- transformer encoder layer `l` (norm_first) -------------
    # self-attention block: x = x + W_o . Attn(LN1(x), causal)
    xn = _layer_norm(x, ln1w_ref[0], ln1b_ref[0])
    qkv = jnp.dot(xn.astype(bf16), wqkv_ref[0],
                  preferred_element_type=jnp.float32) + bqkv_ref[0]  # (M, 3D) f32
    # NOTE: the 1/sqrt(hd) attention scale is pre-folded into the Q columns of
    # wqkv / bqkv at init time, so no per-element scale here.
    # Per-(batch, head) attention: only one (S, S) f32 score tile is live at a
    # time and every op stays 2-D (no tiled<->untiled dim transposes).
    # TODO(synk): for long seq_len, tile queries flash-style (online softmax)
    # instead of materializing the full (S, S) score tile.
    rows = []
    for b in range(BB):
        r0 = b * S
        heads = []
        for h in range(H):
            q = qkv[r0:r0 + S, h * hd:(h + 1) * hd]
            k = qkv[r0:r0 + S, D + h * hd:D + (h + 1) * hd]
            v = qkv[r0:r0 + S, 2 * D + h * hd:2 * D + (h + 1) * hd]
            s = jnp.einsum('qd,kd->qk', q.astype(bf16), k.astype(bf16),
                           preferred_element_type=jnp.float32) + neg   # (S, S) f32
            s = s - jnp.max(s, axis=-1, keepdims=True)
            p = jnp.exp(s)
            p = p * pl.reciprocal(jnp.sum(p, axis=-1, keepdims=True), approx=True)
            heads.append(jnp.dot(p.astype(bf16), v.astype(bf16),
                                 preferred_element_type=jnp.float32))  # (S, hd)
        rows.append(jnp.concatenate(heads, axis=-1))                   # (S, D)
    ctx = rows[0] if BB == 1 else jnp.concatenate(rows, axis=0)        # (M, D)
    # single full-K output projection: concat(heads) @ Wo^T
    attn = jnp.dot(ctx.astype(bf16), wo_ref[0],
                   preferred_element_type=jnp.float32) + bo_ref[0]
    x = x + attn                                    # dropout1: identity (p = 0)

    # feed-forward block: x = x + W2 . relu(W1 . LN2(x))
    xn2 = _layer_norm(x, ln2w_ref[0], ln2b_ref[0])
    h1 = jnp.maximum(jnp.dot(xn2.astype(bf16), w1_ref[0],
                             preferred_element_type=jnp.float32) + b1_ref[0], 0.0)
    ff = jnp.dot(h1.astype(bf16), w2_ref[0],
                 preferred_element_type=jnp.float32) + b2_ref[0]
    x = x + ff                                      # dropout2: identity (p = 0)
    x_ref[...] = x

    # ---------------- last layer: prob_decoder, lane-dense store -------------
    @pl.when(l == pl.num_programs(1) - 1)
    def _():
        logits = jnp.dot(x.astype(bf16), decw_ref[...],
                         preferred_element_type=jnp.float32) + decb_ref[...]  # (M, 256)
        if BB == 1:
            o_ref[...] = logits
        else:
            # (batch, seq)-major rows -> (seq, batch*256) columns, no transpose
            o_ref[...] = jnp.concatenate(
                [logits[b * S:(b + 1) * S] for b in range(BB)], axis=-1)


# ----------------------------- wrapper ---------------------------------------


def _nbytes(a):
    return a.size * jnp.dtype(a.dtype).itemsize


def torch_lm_forward(text_sb, params, cfg, batch_block=None):
    """text_sb: (seq_len, batch) int byte ids -> (seq_len, batch, 256) f32 logits."""
    S, B = text_sb.shape
    V = 256
    D = cfg["d_model"]
    L = cfg["n_layers"]
    F = cfg["ff_dim"]
    if batch_block is None:
        # Fold batch into the matmul M dimension, but keep >= 2 balanced steps
        # on the parallel grid axis whenever possible (v7x has 2 TensorCores).
        batch_block = max(1, B // 2)
    assert B % batch_block == 0, (B, batch_block)
    nb = B // batch_block
    BB = batch_block
    M = BB * S

    # shift-right on the tiny (S, B) int token array; -1 sentinel -> zero row
    tok = jnp.concatenate(
        [jnp.full((1, B), -1, jnp.int32), text_sb[:-1].astype(jnp.int32)], axis=0)
    tok = tok.T.reshape(nb, M, 1)                    # per block: (batch, seq) rows

    args = ((tok,)
            + tuple(params[k] for k in ("emb", "pos"))
            + tuple(params[k] for k in _PER_LAYER_KEYS)
            + tuple(params[k] for k in ("dec_w_t", "dec_b")))

    def invariant_spec(a):
        nd = a.ndim
        return pl.BlockSpec(a.shape, lambda b, l, _nd=nd: (0,) * _nd)

    def per_layer_spec(a):
        nd = a.ndim
        return pl.BlockSpec((1,) + a.shape[1:],
                            lambda b, l, _nd=nd: (l,) + (0,) * (_nd - 1))

    in_specs = ([pl.BlockSpec((1, M, 1), lambda b, l: (b, 0, 0))]
                + [invariant_spec(params[k]) for k in ("emb", "pos")]
                + [per_layer_spec(params[k]) for k in _PER_LAYER_KEYS]
                + [invariant_spec(params[k]) for k in ("dec_w_t", "dec_b")])

    # VMEM budget: invariant + one layer's weights (x2 for double buffering),
    # I/O blocks, the resident activation/mask scratch, and transient f32
    # activations, with 2x headroom.  Clamped to v7x's 64 MiB physical VMEM.
    layer_bytes = sum(_nbytes(params[k]) // L for k in _PER_LAYER_KEYS)
    inv_bytes = sum(_nbytes(params[k]) for k in _INVARIANT_KEYS)
    io_bytes = M * 4 + S * BB * V * 4
    scratch_bytes = M * D * 4 + S * S * 4
    act_bytes = 4 * M * (3 * D + F + V + 4 * D) + 4 * 2 * S * S
    est = 2 * (layer_bytes + inv_bytes + io_bytes) + scratch_bytes + act_bytes
    vmem_limit = int(min(64 << 20, max(16 << 20, 2 * est)))

    kern = functools.partial(fused_lm_kernel, num_heads=cfg["num_heads"],
                             seq_len=S, batch_block=BB)
    logits = pl.pallas_call(
        kern,
        out_shape=jax.ShapeDtypeStruct((S, B * V), jnp.float32),
        grid=(nb, L),
        in_specs=in_specs,
        out_specs=pl.BlockSpec((S, BB * V), lambda b, l: (0, b)),
        scratch_shapes=[pltpu.VMEM((M, D), jnp.float32),    # resident activations
                        pltpu.VMEM((S, S), jnp.float32)],   # causal mask
        compiler_params=pltpu.CompilerParams(
            dimension_semantics=("parallel", "arbitrary"),
            vmem_limit_bytes=vmem_limit),
    )(*args)
    return logits.reshape(S, B, V)                   # free row-major reshape


# ----------------------------- parameters ------------------------------------


def init_params(key, cfg):
    S, D = cfg["seq_len"], cfg["d_model"]
    F, L, H = cfg["ff_dim"], cfg["n_layers"], cfg["num_heads"]
    hd = D // H
    scale = 1.0 / math.sqrt(hd)
    keys = jax.random.split(key, 3 + L)
    dec_w = jax.random.normal(keys[2], (256, D), jnp.float32) * 0.02      # PyTorch (out, in)
    params = {
        "pos": jax.random.normal(keys[0], (S, D), jnp.float32),
        # bf16 embedding table feeds the one-hot MXU matmul directly
        # (small deliberate numeric shift vs. an f32 reference).
        "emb": (jax.random.normal(keys[1], (256, D), jnp.float32) * 0.02).astype(jnp.bfloat16),
        "dec_w_t": dec_w.T.astype(jnp.bfloat16),                          # (D, 256)
        "dec_b": jnp.zeros((1, 256), jnp.float32),
    }
    # 1/sqrt(hd) attention scale folded into the Q columns of W_qkv^T / b_qkv.
    col_scale = jnp.concatenate(
        [jnp.full((D,), scale, jnp.float32), jnp.ones((2 * D,), jnp.float32)])
    acc = {k: [] for k in _PER_LAYER_KEYS}
    for l in range(L):
        ks = jax.random.split(keys[3 + l], 4)
        wqkv = jax.random.normal(ks[0], (3 * D, D), jnp.float32) * 0.05    # in_proj_weight
        wo = jax.random.normal(ks[1], (D, D), jnp.float32) * 0.05          # out_proj.weight
        w1 = jax.random.normal(ks[2], (F, D), jnp.float32) * 0.05
        w2 = jax.random.normal(ks[3], (D, F), jnp.float32) * 0.05
        acc["ln1_w"].append(jnp.ones((1, D), jnp.float32))
        acc["ln1_b"].append(jnp.zeros((1, D), jnp.float32))
        acc["ln2_w"].append(jnp.ones((1, D), jnp.float32))
        acc["ln2_b"].append(jnp.zeros((1, D), jnp.float32))
        acc["wqkv_t"].append((wqkv.T * col_scale[None, :]).astype(jnp.bfloat16))  # (D, 3D)
        acc["bqkv"].append(jnp.zeros((1, 3 * D), jnp.float32) * col_scale[None, :])
        acc["wo_t"].append(wo.T.astype(jnp.bfloat16))                      # (D, D) flat Wo^T
        acc["bo"].append(jnp.zeros((1, D), jnp.float32))
        acc["w1_t"].append(w1.T.astype(jnp.bfloat16))                      # (D, F)
        acc["b1"].append(jnp.zeros((1, F), jnp.float32))
        acc["w2_t"].append(w2.T.astype(jnp.bfloat16))                      # (F, D)
        acc["b2"].append(jnp.zeros((1, D), jnp.float32))
    params.update({k: jnp.stack(v) for k, v in acc.items()})
    return params


# ----------------------------- main -------------------------------------------

if __name__ == "__main__":
    cfg = dict(seq_len=8, d_model=32, num_heads=4, ff_dim=64,
               n_layers=2, dropout=0.0)
    key = jax.random.PRNGKey(0)
    pkey, dkey = jax.random.split(key)
    params = init_params(pkey, cfg)

    batch = 2
    text = jax.random.randint(dkey, (cfg["seq_len"], batch), 0, 256,
                              dtype=jnp.int32)                  # (seq, batch) byte ids

    fwd = jax.jit(functools.partial(torch_lm_forward, cfg=cfg))
    out = jax.block_until_ready(fwd(text, params))
    assert out.shape == (cfg["seq_len"], batch, 256), out.shape
    assert bool(jnp.all(jnp.isfinite(out)))
    print("KERNEL_OK")
</pallas_src>

<mosaic_0001>
module attributes {stable_mosaic.version = 11 : i64} {
  func.func @fused_lm_kernel(%arg0: i32, %arg1: i32, %arg2: memref<1x8x1xi32, #tpu.memory_space<vmem>>, %arg3: memref<256x32xbf16, #tpu.memory_space<vmem>>, %arg4: memref<8x32xf32, #tpu.memory_space<vmem>>, %arg5: memref<1x1x32xf32, #tpu.memory_space<vmem>>, %arg6: memref<1x1x32xf32, #tpu.memory_space<vmem>>, %arg7: memref<1x32x96xbf16, #tpu.memory_space<vmem>>, %arg8: memref<1x1x96xf32, #tpu.memory_space<vmem>>, %arg9: memref<1x32x32xbf16, #tpu.memory_space<vmem>>, %arg10: memref<1x1x32xf32, #tpu.memory_space<vmem>>, %arg11: memref<1x1x32xf32, #tpu.memory_space<vmem>>, %arg12: memref<1x1x32xf32, #tpu.memory_space<vmem>>, %arg13: memref<1x32x64xbf16, #tpu.memory_space<vmem>>, %arg14: memref<1x1x64xf32, #tpu.memory_space<vmem>>, %arg15: memref<1x64x32xbf16, #tpu.memory_space<vmem>>, %arg16: memref<1x1x32xf32, #tpu.memory_space<vmem>>, %arg17: memref<32x256xbf16, #tpu.memory_space<vmem>>, %arg18: memref<1x256xf32, #tpu.memory_space<vmem>>, %arg19: memref<8x256xf32, #tpu.memory_space<vmem>>, %arg20: memref<8x32xf32, #tpu.memory_space<vmem>>, %arg21: memref<8x8xf32, #tpu.memory_space<vmem>>) attributes {dimension_semantics = [#tpu.dimension_semantics<parallel>, #tpu.dimension_semantics<arbitrary>], iteration_bounds = array<i64: 2, 2>, scalar_prefetch = 0 : i64, scratch_operands = 2 : i64, tpu.core_type = #tpu.core_type<tc>, window_params = [{transform_indices = @transform_0, window_bounds = array<i64: 1, 8, 1>}, {pipeline_mode = #tpu.pipeline_mode<synchronous>, transform_indices = @transform_1, window_bounds = array<i64: 256, 32>}, {pipeline_mode = #tpu.pipeline_mode<synchronous>, transform_indices = @transform_2, window_bounds = array<i64: 8, 32>}, {transform_indices = @transform_3, window_bounds = array<i64: 1, 1, 32>}, {transform_indices = @transform_4, window_bounds = array<i64: 1, 1, 32>}, {transform_indices = @transform_5, window_bounds = array<i64: 1, 32, 96>}, {transform_indices = @transform_6, window_bounds = array<i64: 1, 1, 96>}, {transform_indices = @transform_7, window_bounds = array<i64: 1, 32, 32>}, {transform_indices = @transform_8, window_bounds = array<i64: 1, 1, 32>}, {transform_indices = @transform_9, window_bounds = array<i64: 1, 1, 32>}, {transform_indices = @transform_10, window_bounds = array<i64: 1, 1, 32>}, {transform_indices = @transform_11, window_bounds = array<i64: 1, 32, 64>}, {transform_indices = @transform_12, window_bounds = array<i64: 1, 1, 64>}, {transform_indices = @transform_13, window_bounds = array<i64: 1, 64, 32>}, {transform_indices = @transform_14, window_bounds = array<i64: 1, 1, 32>}, {pipeline_mode = #tpu.pipeline_mode<synchronous>, transform_indices = @transform_15, window_bounds = array<i64: 32, 256>}, {pipeline_mode = #tpu.pipeline_mode<synchronous>, transform_indices = @transform_16, window_bounds = array<i64: 1, 256>}, {transform_indices = @transform_17, window_bounds = array<i64: 8, 256>}]} {
    %c0_i32 = arith.constant 0 : i32
    %0 = arith.cmpi eq, %arg1, %c0_i32 : i32
    %1 = arith.extui %0 : i1 to i32
    %c0_i32_0 = arith.constant 0 : i32
    %2 = arith.cmpi ne, %1, %c0_i32_0 : i32
    scf.if %2 {
      %c0_73 = arith.constant 0 : index
      %c0_74 = arith.constant 0 : index
      %c0_75 = arith.constant 0 : index
      %178 = vector.load %arg2[%c0_73, %c0_74, %c0_75] : memref<1x8x1xi32, #tpu.memory_space<vmem>>, vector<1x8x1xi32>
      %179 = vector.shape_cast %178 : vector<1x8x1xi32> to vector<8x1xi32>
      %180 = tpu.iota {dimensions = array<i32: 1>} : vector<8x256xi32>
      %181 = vector.broadcast %179 : vector<8x1xi32> to vector<8x256xi32>
      %182 = arith.cmpi eq, %180, %181 : vector<8x256xi32>
      %183 = arith.extui %182 : vector<8x256xi1> to vector<8x256xi32>
      %184 = arith.sitofp %183 : vector<8x256xi32> to vector<8x256xf32>
      %185 = arith.truncf %184 : vector<8x256xf32> to vector<8x256xbf16>
      %c0_76 = arith.constant 0 : index
      %c0_77 = arith.constant 0 : index
      %186 = vector.load %arg3[%c0_76, %c0_77] : memref<256x32xbf16, #tpu.memory_space<vmem>>, vector<256x32xbf16>
      %cst_78 = arith.constant dense<0.000000e+00> : vector<8x32xf32>
      %187 = tpu.matmul %185, %186, %cst_78 {dimension_numbers = #tpu.dot_dimension_numbers<[1], [0], [0], [1], [0, 0, 1, 1], [], []>} : vector<8x256xbf16>, vector<256x32xbf16>, vector<8x32xf32> -> vector<8x32xf32>
      %c0_79 = arith.constant 0 : index
      %c0_80 = arith.constant 0 : index
      %188 = vector.load %arg4[%c0_79, %c0_80] : memref<8x32xf32, #tpu.memory_space<vmem>>, vector<8x32xf32>
      %189 = arith.addf %187, %188 : vector<8x32xf32>
      %c0_81 = arith.constant 0 : index
      %c0_82 = arith.constant 0 : index
      %190 = vector.load %arg20[%c0_81, %c0_82] : memref<8x32xf32, #tpu.memory_space<vmem>>, vector<8x32xf32>
      tpu.vector_store %arg20[%c0_81, %c0_82], %189 {strides = array<i32>} : memref<8x32xf32, #tpu.memory_space<vmem>>, vector<8x32xf32>,
      %191 = tpu.iota {dimensions = array<i32: 0>} : vector<8x8xi32>
      %192 = tpu.iota {dimensions = array<i32: 1>} : vector<8x8xi32>
      %193 = arith.cmpi sgt, %192, %191 : vector<8x8xi32>
      %cst_83 = arith.constant -1.000000e+30 : f32
      %cst_84 = arith.constant 0.000000e+00 : f32
      %194 = vector.broadcast %cst_83 : f32 to vector<8x8xf32>
      %195 = vector.broadcast %cst_84 : f32 to vector<8x8xf32>
      %196 = arith.select %193, %194, %195 : vector<8x8xi1>, vector<8x8xf32>
      %c0_85 = arith.constant 0 : index
      %c0_86 = arith.constant 0 : index
      %197 = vector.load %arg21[%c0_85, %c0_86] : memref<8x8xf32, #tpu.memory_space<vmem>>, vector<8x8xf32>
      tpu.vector_store %arg21[%c0_85, %c0_86], %196 {strides = array<i32>} : memref<8x8xf32, #tpu.memory_space<vmem>>, vector<8x8xf32>,
    } else {
    }
    %c0 = arith.constant 0 : index
    %c0_1 = arith.constant 0 : index
    %3 = vector.load %arg20[%c0, %c0_1] : memref<8x32xf32, #tpu.memory_space<vmem>>, vector<8x32xf32>
    %c0_2 = arith.constant 0 : index
    %c0_3 = arith.constant 0 : index
    %4 = vector.load %arg21[%c0_2, %c0_3] : memref<8x8xf32, #tpu.memory_space<vmem>>, vector<8x8xf32>
    %c0_4 = arith.constant 0 : index
    %c0_5 = arith.constant 0 : index
    %c0_6 = arith.constant 0 : index
    %5 = vector.load %arg5[%c0_4, %c0_5, %c0_6] : memref<1x1x32xf32, #tpu.memory_space<vmem>>, vector<1x1x32xf32>
    %6 = vector.shape_cast %5 : vector<1x1x32xf32> to vector<1x32xf32>
    %c0_7 = arith.constant 0 : index
    %c0_8 = arith.constant 0 : index
    %c0_9 = arith.constant 0 : index
    %7 = vector.load %arg6[%c0_7, %c0_8, %c0_9] : memref<1x1x32xf32, #tpu.memory_space<vmem>>, vector<1x1x32xf32>
    %8 = vector.shape_cast %7 : vector<1x1x32xf32> to vector<1x32xf32>
    %cst = arith.constant dense<0.000000e+00> : vector<8xf32>
    %9 = vector.multi_reduction <add>, %3, %cst [1] : vector<8x32xf32> to vector<8xf32>
    %10 = vector.shape_cast %9 : vector<8xf32> to vector<8x1xf32>
    %cst_10 = arith.constant 3.200000e+01 : f32
    %11 = vector.broadcast %cst_10 : f32 to vector<8x1xf32>
    %12 = arith.divf %10, %11 : vector<8x1xf32>
    %13 = vector.broadcast %12 : vector<8x1xf32> to vector<8x32xf32>
    %14 = arith.subf %3, %13 : vector<8x32xf32>
    %15 = arith.mulf %14, %14 : vector<8x32xf32>
    %cst_11 = arith.constant dense<0.000000e+00> : vector<8xf32>
    %16 = vector.multi_reduction <add>, %15, %cst_11 [1] : vector<8x32xf32> to vector<8xf32>
    %17 = vector.shape_cast %16 : vector<8xf32> to vector<8x1xf32>
    %cst_12 = arith.constant 3.200000e+01 : f32
    %18 = vector.broadcast %cst_12 : f32 to vector<8x1xf32>
    %19 = arith.divf %17, %18 : vector<8x1xf32>
    %20 = vector.broadcast %12 : vector<8x1xf32> to vector<8x32xf32>
    %21 = arith.subf %3, %20 : vector<8x32xf32>
    %cst_13 = arith.constant 9.99999974E-6 : f32
    %22 = vector.broadcast %cst_13 : f32 to vector<8x1xf32>
    %23 = arith.addf %19, %22 : vector<8x1xf32>
    %24 = math.rsqrt %23 : vector<8x1xf32>
    %25 = vector.broadcast %24 : vector<8x1xf32> to vector<8x32xf32>
    %26 = arith.mulf %21, %25 : vector<8x32xf32>
    %27 = vector.broadcast %6 : vector<1x32xf32> to vector<8x32xf32>
    %28 = arith.mulf %26, %27 : vector<8x32xf32>
    %29 = vector.broadcast %8 : vector<1x32xf32> to vector<8x32xf32>
    %30 = arith.addf %28, %29 : vector<8x32xf32>
    %31 = arith.truncf %30 : vector<8x32xf32> to vector<8x32xbf16>
    %c0_14 = arith.constant 0 : index
    %c0_15 = arith.constant 0 : index
    %c0_16 = arith.constant 0 : index
    %32 = vector.load %arg7[%c0_14, %c0_15, %c0_16] : memref<1x32x96xbf16, #tpu.memory_space<vmem>>, vector<1x32x96xbf16>
    %33 = vector.shape_cast %32 : vector<1x32x96xbf16> to vector<32x96xbf16>
    %cst_17 = arith.constant dense<0.000000e+00> : vector<8x96xf32>
    %34 = tpu.matmul %31, %33, %cst_17 {dimension_numbers = #tpu.dot_dimension_numbers<[1], [0], [0], [1], [0, 0, 1, 1], [], []>} : vector<8x32xbf16>, vector<32x96xbf16>, vector<8x96xf32> -> vector<8x96xf32>
    %c0_18 = arith.constant 0 : index
    %c0_19 = arith.constant 0 : index
    %c0_20 = arith.constant 0 : index
    %35 = vector.load %arg8[%c0_18, %c0_19, %c0_20] : memref<1x1x96xf32, #tpu.memory_space<vmem>>, vector<1x1x96xf32>
    %36 = vector.shape_cast %35 : vector<1x1x96xf32> to vector<1x96xf32>
    %37 = vector.broadcast %36 : vector<1x96xf32> to vector<8x96xf32>
    %38 = arith.addf %34, %37 : vector<8x96xf32>
    %39 = vector.extract_strided_slice %38 {offsets = [0, 0], sizes = [8, 8], strides = [1, 1]} : vector<8x96xf32> to vector<8x8xf32>
    %40 = vector.extract_strided_slice %38 {offsets = [0, 32], sizes = [8, 8], strides = [1, 1]} : vector<8x96xf32> to vector<8x8xf32>
    %41 = vector.extract_strided_slice %38 {offsets = [0, 64], sizes = [8, 8], strides = [1, 1]} : vector<8x96xf32> to vector<8x8xf32>
    %42 = arith.truncf %39 : vector<8x8xf32> to vector<8x8xbf16>
    %43 = arith.truncf %40 : vector<8x8xf32> to vector<8x8xbf16>
    "tpu.trace_start"() <{level = 10 : i32, message = "qd,kd->qk"}> : () -> ()
    %cst_21 = arith.constant dense<0.000000e+00> : vector<8x8xf32>
    %44 = tpu.matmul %42, %43, %cst_21 {dimension_numbers = #tpu.dot_dimension_numbers<[1], [1], [0], [0], [0, 0, 1, 0], [], []>} : vector<8x8xbf16>, vector<8x8xbf16>, vector<8x8xf32> -> vector<8x8xf32>
    "tpu.trace_stop"() : () -> ()
    %45 = arith.addf %44, %4 : vector<8x8xf32>
    %cst_22 = arith.constant dense<0xFF800000> : vector<8xf32>
    %46 = vector.multi_reduction <maximumf>, %45, %cst_22 [1] : vector<8x8xf32> to vector<8xf32>
    %47 = vector.shape_cast %46 : vector<8xf32> to vector<8x1xf32>
    %48 = vector.broadcast %47 : vector<8x1xf32> to vector<8x8xf32>
    %49 = arith.subf %45, %48 : vector<8x8xf32>
    %50 = math.exp %49 : vector<8x8xf32>
    %cst_23 = arith.constant dense<0.000000e+00> : vector<8xf32>
    %51 = vector.multi_reduction <add>, %50, %cst_23 [1] : vector<8x8xf32> to vector<8xf32>
    %52 = vector.shape_cast %51 : vector<8xf32> to vector<8x1xf32>
    %53 = tpu.reciprocal %52 {approx = true} : vector<8x1xf32> -> vector<8x1xf32>
    %54 = vector.broadcast %53 : vector<8x1xf32> to vector<8x8xf32>
    %55 = arith.mulf %50, %54 : vector<8x8xf32>
    %56 = arith.truncf %55 : vector<8x8xf32> to vector<8x8xbf16>
    %57 = arith.truncf %41 : vector<8x8xf32> to vector<8x8xbf16>
    %cst_24 = arith.constant dense<0.000000e+00> : vector<8x8xf32>
    %58 = tpu.matmul %56, %57, %cst_24 {dimension_numbers = #tpu.dot_dimension_numbers<[1], [0], [0], [1], [0, 0, 1, 1], [], []>} : vector<8x8xbf16>, vector<8x8xbf16>, vector<8x8xf32> -> vector<8x8xf32>
    %59 = vector.extract_strided_slice %38 {offsets = [0, 8], sizes = [8, 8], strides = [1, 1]} : vector<8x96xf32> to vector<8x8xf32>
    %60 = vector.extract_strided_slice %38 {offsets = [0, 40], sizes = [8, 8], strides = [1, 1]} : vector<8x96xf32> to vector<8x8xf32>
    %61 = vector.extract_strided_slice %38 {offsets = [0, 72], sizes = [8, 8], strides = [1, 1]} : vector<8x96xf32> to vector<8x8xf32>
    %62 = arith.truncf %59 : vector<8x8xf32> to vector<8x8xbf16>
    %63 = arith.truncf %60 : vector<8x8xf32> to vector<8x8xbf16>
    "tpu.trace_start"() <{level = 10 : i32, message = "qd,kd->qk"}> : () -> ()
    %cst_25 = arith.constant dense<0.000000e+00> : vector<8x8xf32>
    %64 = tpu.matmul %62, %63, %cst_25 {dimension_numbers = #tpu.dot_dimension_numbers<[1], [1], [0], [0], [0, 0, 1, 0], [], []>} : vector<8x8xbf16>, vector<8x8xbf16>, vector<8x8xf32> -> vector<8x8xf32>
    "tpu.trace_stop"() : () -> ()
    %65 = arith.addf %64, %4 : vector<8x8xf32>
    %cst_26 = arith.constant dense<0xFF800000> : vector<8xf32>
    %66 = vector.multi_reduction <maximumf>, %65, %cst_26 [1] : vector<8x8xf32> to vector<8xf32>
    %67 = vector.shape_cast %66 : vector<8xf32> to vector<8x1xf32>
    %68 = vector.broadcast %67 : vector<8x1xf32> to vector<8x8xf32>
    %69 = arith.subf %65, %68 : vector<8x8xf32>
    %70 = math.exp %69 : vector<8x8xf32>
    %cst_27 = arith.constant dense<0.000000e+00> : vector<8xf32>
    %71 = vector.multi_reduction <add>, %70, %cst_27 [1] : vector<8x8xf32> to vector<8xf32>
    %72 = vector.shape_cast %71 : vector<8xf32> to vector<8x1xf32>
    %73 = tpu.reciprocal %72 {approx = true} : vector<8x1xf32> -> vector<8x1xf32>
    %74 = vector.broadcast %73 : vector<8x1xf32> to vector<8x8xf32>
    %75 = arith.mulf %70, %74 : vector<8x8xf32>
    %76 = arith.truncf %75 : vector<8x8xf32> to vector<8x8xbf16>
    %77 = arith.truncf %61 : vector<8x8xf32> to vector<8x8xbf16>
    %cst_28 = arith.constant dense<0.000000e+00> : vector<8x8xf32>
    %78 = tpu.matmul %76, %77, %cst_28 {dimension_numbers = #tpu.dot_dimension_numbers<[1], [0], [0], [1], [0, 0, 1, 1], [], []>} : vector<8x8xbf16>, vector<8x8xbf16>, vector<8x8xf32> -> vector<8x8xf32>
    %79 = vector.extract_strided_slice %38 {offsets = [0, 16], sizes = [8, 8], strides = [1, 1]} : vector<8x96xf32> to vector<8x8xf32>
    %80 = vector.extract_strided_slice %38 {offsets = [0, 48], sizes = [8, 8], strides = [1, 1]} : vector<8x96xf32> to vector<8x8xf32>
    %81 = vector.extract_strided_slice %38 {offsets = [0, 80], sizes = [8, 8], strides = [1, 1]} : vector<8x96xf32> to vector<8x8xf32>
    %82 = arith.truncf %79 : vector<8x8xf32> to vector<8x8xbf16>
    %83 = arith.truncf %80 : vector<8x8xf32> to vector<8x8xbf16>
    "tpu.trace_start"() <{level = 10 : i32, message = "qd,kd->qk"}> : () -> ()
    %cst_29 = arith.constant dense<0.000000e+00> : vector<8x8xf32>
    %84 = tpu.matmul %82, %83, %cst_29 {dimension_numbers = #tpu.dot_dimension_numbers<[1], [1], [0], [0], [0, 0, 1, 0], [], []>} : vector<8x8xbf16>, vector<8x8xbf16>, vector<8x8xf32> -> vector<8x8xf32>
    "tpu.trace_stop"() : () -> ()
    %85 = arith.addf %84, %4 : vector<8x8xf32>
    %cst_30 = arith.constant dense<0xFF800000> : vector<8xf32>
    %86 = vector.multi_reduction <maximumf>, %85, %cst_30 [1] : vector<8x8xf32> to vector<8xf32>
    %87 = vector.shape_cast %86 : vector<8xf32> to vector<8x1xf32>
    %88 = vector.broadcast %87 : vector<8x1xf32> to vector<8x8xf32>
    %89 = arith.subf %85, %88 : vector<8x8xf32>
    %90 = math.exp %89 : vector<8x8xf32>
    %cst_31 = arith.constant dense<0.000000e+00> : vector<8xf32>
    %91 = vector.multi_reduction <add>, %90, %cst_31 [1] : vector<8x8xf32> to vector<8xf32>
    %92 = vector.shape_cast %91 : vector<8xf32> to vector<8x1xf32>
    %93 = tpu.reciprocal %92 {approx = true} : vector<8x1xf32> -> vector<8x1xf32>
    %94 = vector.broadcast %93 : vector<8x1xf32> to vector<8x8xf32>
    %95 = arith.mulf %90, %94 : vector<8x8xf32>
    %96 = arith.truncf %95 : vector<8x8xf32> to vector<8x8xbf16>
    %97 = arith.truncf %81 : vector<8x8xf32> to vector<8x8xbf16>
    %cst_32 = arith.constant dense<0.000000e+00> : vector<8x8xf32>
    %98 = tpu.matmul %96, %97, %cst_32 {dimension_numbers = #tpu.dot_dimension_numbers<[1], [0], [0], [1], [0, 0, 1, 1], [], []>} : vector<8x8xbf16>, vector<8x8xbf16>, vector<8x8xf32> -> vector<8x8xf32>
    %99 = vector.extract_strided_slice %38 {offsets = [0, 24], sizes = [8, 8], strides = [1, 1]} : vector<8x96xf32> to vector<8x8xf32>
    %100 = vector.extract_strided_slice %38 {offsets = [0, 56], sizes = [8, 8], strides = [1, 1]} : vector<8x96xf32> to vector<8x8xf32>
    %101 = vector.extract_strided_slice %38 {offsets = [0, 88], sizes = [8, 8], strides = [1, 1]} : vector<8x96xf32> to vector<8x8xf32>
    %102 = arith.truncf %99 : vector<8x8xf32> to vector<8x8xbf16>
    %103 = arith.truncf %100 : vector<8x8xf32> to vector<8x8xbf16>
    "tpu.trace_start"() <{level = 10 : i32, message = "qd,kd->qk"}> : () -> ()
    %cst_33 = arith.constant dense<0.000000e+00> : vector<8x8xf32>
    %104 = tpu.matmul %102, %103, %cst_33 {dimension_numbers = #tpu.dot_dimension_numbers<[1], [1], [0], [0], [0, 0, 1, 0], [], []>} : vector<8x8xbf16>, vector<8x8xbf16>, vector<8x8xf32> -> vector<8x8xf32>
    "tpu.trace_stop"() : () -> ()
    %105 = arith.addf %104, %4 : vector<8x8xf32>
    %cst_34 = arith.constant dense<0xFF800000> : vector<8xf32>
    %106 = vector.multi_reduction <maximumf>, %105, %cst_34 [1] : vector<8x8xf32> to vector<8xf32>
    %107 = vector.shape_cast %106 : vector<8xf32> to vector<8x1xf32>
    %108 = vector.broadcast %107 : vector<8x1xf32> to vector<8x8xf32>
    %109 = arith.subf %105, %108 : vector<8x8xf32>
    %110 = math.exp %109 : vector<8x8xf32>
    %cst_35 = arith.constant dense<0.000000e+00> : vector<8xf32>
    %111 = vector.multi_reduction <add>, %110, %cst_35 [1] : vector<8x8xf32> to vector<8xf32>
    %112 = vector.shape_cast %111 : vector<8xf32> to vector<8x1xf32>
    %113 = tpu.reciprocal %112 {approx = true} : vector<8x1xf32> -> vector<8x1xf32>
    %114 = vector.broadcast %113 : vector<8x1xf32> to vector<8x8xf32>
    %115 = arith.mulf %110, %114 : vector<8x8xf32>
    %116 = arith.truncf %115 : vector<8x8xf32> to vector<8x8xbf16>
    %117 = arith.truncf %101 : vector<8x8xf32> to vector<8x8xbf16>
    %cst_36 = arith.constant dense<0.000000e+00> : vector<8x8xf32>
    %118 = tpu.matmul %116, %117, %cst_36 {dimension_numbers = #tpu.dot_dimension_numbers<[1], [0], [0], [1], [0, 0, 1, 1], [], []>} : vector<8x8xbf16>, vector<8x8xbf16>, vector<8x8xf32> -> vector<8x8xf32>
    %119 = tpu.concatenate %58, %78, %98, %118 in 1 : vector<8x8xf32>, vector<8x8xf32>, vector<8x8xf32>, vector<8x8xf32> -> vector<8x32xf32>
    %120 = arith.truncf %119 : vector<8x32xf32> to vector<8x32xbf16>
    %c0_37 = arith.constant 0 : index
    %c0_38 = arith.constant 0 : index
    %c0_39 = arith.constant 0 : index
    %121 = vector.load %arg9[%c0_37, %c0_38, %c0_39] : memref<1x32x32xbf16, #tpu.memory_space<vmem>>, vector<1x32x32xbf16>
    %122 = vector.shape_cast %121 : vector<1x32x32xbf16> to vector<32x32xbf16>
    %cst_40 = arith.constant dense<0.000000e+00> : vector<8x32xf32>
    %123 = tpu.matmul %120, %122, %cst_40 {dimension_numbers = #tpu.dot_dimension_numbers<[1], [0], [0], [1], [0, 0, 1, 1], [], []>} : vector<8x32xbf16>, vector<32x32xbf16>, vector<8x32xf32> -> vector<8x32xf32>
    %c0_41 = arith.constant 0 : index
    %c0_42 = arith.constant 0 : index
    %c0_43 = arith.constant 0 : index
    %124 = vector.load %arg10[%c0_41, %c0_42, %c0_43] : memref<1x1x32xf32, #tpu.memory_space<vmem>>, vector<1x1x32xf32>
    %125 = vector.shape_cast %124 : vector<1x1x32xf32> to vector<1x32xf32>
    %126 = vector.broadcast %125 : vector<1x32xf32> to vector<8x32xf32>
    %127 = arith.addf %123, %126 : vector<8x32xf32>
    %128 = arith.addf %3, %127 : vector<8x32xf32>
    %c0_44 = arith.constant 0 : index
    %c0_45 = arith.constant 0 : index
    %c0_46 = arith.constant 0 : index
    %129 = vector.load %arg11[%c0_44, %c0_45, %c0_46] : memref<1x1x32xf32, #tpu.memory_space<vmem>>, vector<1x1x32xf32>
    %130 = vector.shape_cast %129 : vector<1x1x32xf32> to vector<1x32xf32>
    %c0_47 = arith.constant 0 : index
    %c0_48 = arith.constant 0 : index
    %c0_49 = arith.constant 0 : index
    %131 = vector.load %arg12[%c0_47, %c0_48, %c0_49] : memref<1x1x32xf32, #tpu.memory_space<vmem>>, vector<1x1x32xf32>
    %132 = vector.shape_cast %131 : vector<1x1x32xf32> to vector<1x32xf32>
    %cst_50 = arith.constant dense<0.000000e+00> : vector<8xf32>
    %133 = vector.multi_reduction <add>, %128, %cst_50 [1] : vector<8x32xf32> to vector<8xf32>
    %134 = vector.shape_cast %133 : vector<8xf32> to vector<8x1xf32>
    %cst_51 = arith.constant 3.200000e+01 : f32
    %135 = vector.broadcast %cst_51 : f32 to vector<8x1xf32>
    %136 = arith.divf %134, %135 : vector<8x1xf32>
    %137 = vector.broadcast %136 : vector<8x1xf32> to vector<8x32xf32>
    %138 = arith.subf %128, %137 : vector<8x32xf32>
    %139 = arith.mulf %138, %138 : vector<8x32xf32>
    %cst_52 = arith.constant dense<0.000000e+00> : vector<8xf32>
    %140 = vector.multi_reduction <add>, %139, %cst_52 [1] : vector<8x32xf32> to vector<8xf32>
    %141 = vector.shape_cast %140 : vector<8xf32> to vector<8x1xf32>
    %cst_53 = arith.constant 3.200000e+01 : f32
    %142 = vector.broadcast %cst_53 : f32 to vector<8x1xf32>
    %143 = arith.divf %141, %142 : vector<8x1xf32>
    %144 = vector.broadcast %136 : vector<8x1xf32> to vector<8x32xf32>
    %145 = arith.subf %128, %144 : vector<8x32xf32>
    %cst_54 = arith.constant 9.99999974E-6 : f32
    %146 = vector.broadcast %cst_54 : f32 to vector<8x1xf32>
    %147 = arith.addf %143, %146 : vector<8x1xf32>
    %148 = math.rsqrt %147 : vector<8x1xf32>
    %149 = vector.broadcast %148 : vector<8x1xf32> to vector<8x32xf32>
    %150 = arith.mulf %145, %149 : vector<8x32xf32>
    %151 = vector.broadcast %130 : vector<1x32xf32> to vector<8x32xf32>
    %152 = arith.mulf %150, %151 : vector<8x32xf32>
    %153 = vector.broadcast %132 : vector<1x32xf32> to vector<8x32xf32>
    %154 = arith.addf %152, %153 : vector<8x32xf32>
    %155 = arith.truncf %154 : vector<8x32xf32> to vector<8x32xbf16>
    %c0_55 = arith.constant 0 : index
    %c0_56 = arith.constant 0 : index
    %c0_57 = arith.constant 0 : index
    %156 = vector.load %arg13[%c0_55, %c0_56, %c0_57] : memref<1x32x64xbf16, #tpu.memory_space<vmem>>, vector<1x32x64xbf16>
    %157 = vector.shape_cast %156 : vector<1x32x64xbf16> to vector<32x64xbf16>
    %cst_58 = arith.constant dense<0.000000e+00> : vector<8x64xf32>
    %158 = tpu.matmul %155, %157, %cst_58 {dimension_numbers = #tpu.dot_dimension_numbers<[1], [0], [0], [1], [0, 0, 1, 1], [], []>} : vector<8x32xbf16>, vector<32x64xbf16>, vector<8x64xf32> -> vector<8x64xf32>
    %c0_59 = arith.constant 0 : index
    %c0_60 = arith.constant 0 : index
    %c0_61 = arith.constant 0 : index
    %159 = vector.load %arg14[%c0_59, %c0_60, %c0_61] : memref<1x1x64xf32, #tpu.memory_space<vmem>>, vector<1x1x64xf32>
    %160 = vector.shape_cast %159 : vector<1x1x64xf32> to vector<1x64xf32>
    %161 = vector.broadcast %160 : vector<1x64xf32> to vector<8x64xf32>
    %162 = arith.addf %158, %161 : vector<8x64xf32>
    %cst_62 = arith.constant 0.000000e+00 : f32
    %163 = vector.broadcast %cst_62 : f32 to vector<8x64xf32>
    %164 = arith.maximumf %162, %163 : vector<8x64xf32>
    %165 = arith.truncf %164 : vector<8x64xf32> to vector<8x64xbf16>
    %c0_63 = arith.constant 0 : index
    %c0_64 = arith.constant 0 : index
    %c0_65 = arith.constant 0 : index
    %166 = vector.load %arg15[%c0_63, %c0_64, %c0_65] : memref<1x64x32xbf16, #tpu.memory_space<vmem>>, vector<1x64x32xbf16>
    %167 = vector.shape_cast %166 : vector<1x64x32xbf16> to vector<64x32xbf16>
    %cst_66 = arith.constant dense<0.000000e+00> : vector<8x32xf32>
    %168 = tpu.matmul %165, %167, %cst_66 {dimension_numbers = #tpu.dot_dimension_numbers<[1], [0], [0], [1], [0, 0, 1, 1], [], []>} : vector<8x64xbf16>, vector<64x32xbf16>, vector<8x32xf32> -> vector<8x32xf32>
    %c0_67 = arith.constant 0 : index
    %c0_68 = arith.constant 0 : index
    %c0_69 = arith.constant 0 : index
    %169 = vector.load %arg16[%c0_67, %c0_68, %c0_69] : memref<1x1x32xf32, #tpu.memory_space<vmem>>, vector<1x1x32xf32>
    %170 = vector.shape_cast %169 : vector<1x1x32xf32> to vector<1x32xf32>
    %171 = vector.broadcast %170 : vector<1x32xf32> to vector<8x32xf32>
    %172 = arith.addf %168, %171 : vector<8x32xf32>
    %173 = arith.addf %128, %172 : vector<8x32xf32>
    %c0_70 = arith.constant 0 : index
    %c0_71 = arith.constant 0 : index
    %174 = vector.load %arg20[%c0_70, %c0_71] : memref<8x32xf32, #tpu.memory_space<vmem>>, vector<8x32xf32>
    tpu.vector_store %arg20[%c0_70, %c0_71], %173 {strides = array<i32>} : memref<8x32xf32, #tpu.memory_space<vmem>>, vector<8x32xf32>,
    %c1_i32 = arith.constant 1 : i32
    %175 = arith.cmpi eq, %arg1, %c1_i32 : i32
    %176 = arith.extui %175 : i1 to i32
    %c0_i32_72 = arith.constant 0 : i32
    %177 = arith.cmpi ne, %176, %c0_i32_72 : i32
    scf.if %177 {
      %178 = arith.truncf %173 : vector<8x32xf32> to vector<8x32xbf16>
      %c0_73 = arith.constant 0 : index
      %c0_74 = arith.constant 0 : index
      %179 = vector.load %arg17[%c0_73, %c0_74] : memref<32x256xbf16, #tpu.memory_space<vmem>>, vector<32x256xbf16>
      %cst_75 = arith.constant dense<0.000000e+00> : vector<8x256xf32>
      %180 = tpu.matmul %178, %179, %cst_75 {dimension_numbers = #tpu.dot_dimension_numbers<[1], [0], [0], [1], [0, 0, 1, 1], [], []>} : vector<8x32xbf16>, vector<32x256xbf16>, vector<8x256xf32> -> vector<8x256xf32>
      %c0_76 = arith.constant 0 : index
      %c0_77 = arith.constant 0 : index
      %181 = vector.load %arg18[%c0_76, %c0_77] : memref<1x256xf32, #tpu.memory_space<vmem>>, vector<1x256xf32>
      %182 = vector.broadcast %181 : vector<1x256xf32> to vector<8x256xf32>
      %183 = arith.addf %180, %182 : vector<8x256xf32>
      %c0_78 = arith.constant 0 : index
      %c0_79 = arith.constant 0 : index
      %184 = vector.load %arg19[%c0_78, %c0_79] : memref<8x256xf32, #tpu.memory_space<vmem>>, vector<8x256xf32>
      tpu.vector_store %arg19[%c0_78, %c0_79], %183 {strides = array<i32>} : memref<8x256xf32, #tpu.memory_space<vmem>>, vector<8x256xf32>,
    } else {
    }
    return
  }
  func.func @transform_0(%arg0: i32, %arg1: i32) -> (i32, i32, i32) {
    %c0_i32 = arith.constant 0 : i32
    %c0_i32_0 = arith.constant 0 : i32
    %c0_i32_1 = arith.constant 0 : i32
    return %arg0, %c0_i32, %c0_i32_0 : i32, i32, i32
  }
  func.func @transform_1(%arg0: i32, %arg1: i32) -> (i32, i32) {
    %c0_i32 = arith.constant 0 : i32
    %c0_i32_0 = arith.constant 0 : i32
    %c0_i32_1 = arith.constant 0 : i32
    return %c0_i32, %c0_i32_0 : i32, i32
  }
  func.func @transform_2(%arg0: i32, %arg1: i32) -> (i32, i32) {
    %c0_i32 = arith.constant 0 : i32
    %c0_i32_0 = arith.constant 0 : i32
    %c0_i32_1 = arith.constant 0 : i32
    return %c0_i32, %c0_i32_0 : i32, i32
  }
  func.func @transform_3(%arg0: i32, %arg1: i32) -> (i32, i32, i32) {
    %c0_i32 = arith.constant 0 : i32
    %c0_i32_0 = arith.constant 0 : i32
    %c0_i32_1 = arith.constant 0 : i32
    return %arg1, %c0_i32, %c0_i32_0 : i32, i32, i32
  }
  func.func @transform_4(%arg0: i32, %arg1: i32) -> (i32, i32, i32) {
    %c0_i32 = arith.constant 0 : i32
    %c0_i32_0 = arith.constant 0 : i32
    %c0_i32_1 = arith.constant 0 : i32
    return %arg1, %c0_i32, %c0_i32_0 : i32, i32, i32
  }
  func.func @transform_5(%arg0: i32, %arg1: i32) -> (i32, i32, i32) {
    %c0_i32 = arith.constant 0 : i32
    %c0_i32_0 = arith.constant 0 : i32
    %c0_i32_1 = arith.constant 0 : i32
    return %arg1, %c0_i32, %c0_i32_0 : i32, i32, i32
  }
  func.func @transform_6(%arg0: i32, %arg1: i32) -> (i32, i32, i32) {
    %c0_i32 = arith.constant 0 : i32
    %c0_i32_0 = arith.constant 0 : i32
    %c0_i32_1 = arith.constant 0 : i32
    return %arg1, %c0_i32, %c0_i32_0 : i32, i32, i32
  }
  func.func @transform_7(%arg0: i32, %arg1: i32) -> (i32, i32, i32) {
    %c0_i32 = arith.constant 0 : i32
    %c0_i32_0 = arith.constant 0 : i32
    %c0_i32_1 = arith.constant 0 : i32
    return %arg1, %c0_i32, %c0_i32_0 : i32, i32, i32
  }
  func.func @transform_8(%arg0: i32, %arg1: i32) -> (i32, i32, i32) {
    %c0_i32 = arith.constant 0 : i32
    %c0_i32_0 = arith.constant 0 : i32
    %c0_i32_1 = arith.constant 0 : i32
    return %arg1, %c0_i32, %c0_i32_0 : i32, i32, i32
  }
  func.func @transform_9(%arg0: i32, %arg1: i32) -> (i32, i32, i32) {
    %c0_i32 = arith.constant 0 : i32
    %c0_i32_0 = arith.constant 0 : i32
    %c0_i32_1 = arith.constant 0 : i32
    return %arg1, %c0_i32, %c0_i32_0 : i32, i32, i32
  }
  func.func @transform_10(%arg0: i32, %arg1: i32) -> (i32, i32, i32) {
    %c0_i32 = arith.constant 0 : i32
    %c0_i32_0 = arith.constant 0 : i32
    %c0_i32_1 = arith.constant 0 : i32
    return %arg1, %c0_i32, %c0_i32_0 : i32, i32, i32
  }
  func.func @transform_11(%arg0: i32, %arg1: i32) -> (i32, i32, i32) {
    %c0_i32 = arith.constant 0 : i32
    %c0_i32_0 = arith.constant 0 : i32
    %c0_i32_1 = arith.constant 0 : i32
    return %arg1, %c0_i32, %c0_i32_0 : i32, i32, i32
  }
  func.func @transform_12(%arg0: i32, %arg1: i32) -> (i32, i32, i32) {
    %c0_i32 = arith.constant 0 : i32
    %c0_i32_0 = arith.constant 0 : i32
    %c0_i32_1 = arith.constant 0 : i32
    return %arg1, %c0_i32, %c0_i32_0 : i32, i32, i32
  }
  func.func @transform_13(%arg0: i32, %arg1: i32) -> (i32, i32, i32) {
    %c0_i32 = arith.constant 0 : i32
    %c0_i32_0 = arith.constant 0 : i32
    %c0_i32_1 = arith.constant 0 : i32
    return %arg1, %c0_i32, %c0_i32_0 : i32, i32, i32
  }
  func.func @transform_14(%arg0: i32, %arg1: i32) -> (i32, i32, i32) {
    %c0_i32 = arith.constant 0 : i32
    %c0_i32_0 = arith.constant 0 : i32
    %c0_i32_1 = arith.constant 0 : i32
    return %arg1, %c0_i32, %c0_i32_0 : i32, i32, i32
  }
  func.func @transform_15(%arg0: i32, %arg1: i32) -> (i32, i32) {
    %c0_i32 = arith.constant 0 : i32
    %c0_i32_0 = arith.constant 0 : i32
    %c0_i32_1 = arith.constant 0 : i32
    return %c0_i32, %c0_i32_0 : i32, i32
  }
  func.func @transform_16(%arg0: i32, %arg1: i32) -> (i32, i32) {
    %c0_i32 = arith.constant 0 : i32
    %c0_i32_0 = arith.constant 0 : i32
    %c0_i32_1 = arith.constant 0 : i32
    return %c0_i32, %c0_i32_0 : i32, i32
  }
  func.func @transform_17(%arg0: i32, %arg1: i32) -> (i32, i32) {
    %c0_i32 = arith.constant 0 : i32
    %c0_i32_0 = arith.constant 0 : i32
    return %c0_i32, %arg0 : i32, i32
  }
}

</mosaic_0001>

<llo_original>
// kernel: torch_lm_forward.1
$region0: #{torch_lm_forward.1}
  #allocation0 [shape = 'u32[]', space=smem, size = 0x4, offset = 0x4, fixed_abs, tag = 'smem constant byte address 0x4 - core index']
  #allocation1 [shape = 'u32[72,128]{1,0:T(1,128)}', space=vmem, size = 0x9000, scoped, tag = 'internal scratch']
  #allocation2 [shape = 'f32[8,32]{1,0:T(8,128)}', space=vmem, size = 0x1000, scoped, tag = 'scratch operand']
  #allocation3 [shape = 'f32[8,8]{1,0:T(8,128)}', space=vmem, size = 0x1000, scoped, tag = 'scratch operand']
  %s0 = inlined_call_operand.vmem [shape: s32[2,8,1], index: 0, kind: input, shape index: {}]
  %s1 = inlined_call_operand.vmem [shape: bf16[256,32], index: 1, kind: input, shape index: {}]
  %s2 = inlined_call_operand.vmem [shape: f32[8,32], index: 2, kind: input, shape index: {}]
  %s3 = inlined_call_operand.vmem [shape: f32[2,1,32], index: 3, kind: input, shape index: {}]
  %s4 = inlined_call_operand.vmem [shape: f32[2,1,32], index: 4, kind: input, shape index: {}]
  %s5 = inlined_call_operand.vmem [shape: bf16[2,32,96], index: 5, kind: input, shape index: {}]
  %s6 = inlined_call_operand.vmem [shape: f32[2,1,96], index: 6, kind: input, shape index: {}]
  %s7 = inlined_call_operand.vmem [shape: bf16[2,32,32], index: 7, kind: input, shape index: {}]
  %s8 = inlined_call_operand.vmem [shape: f32[2,1,32], index: 8, kind: input, shape index: {}]
  %s9 = inlined_call_operand.vmem [shape: f32[2,1,32], index: 9, kind: input, shape index: {}]
  %s10 = inlined_call_operand.vmem [shape: f32[2,1,32], index: 10, kind: input, shape index: {}]
  %s11 = inlined_call_operand.vmem [shape: bf16[2,32,64], index: 11, kind: input, shape index: {}]
  %s12 = inlined_call_operand.vmem [shape: f32[2,1,64], index: 12, kind: input, shape index: {}]
  %s13 = inlined_call_operand.vmem [shape: bf16[2,64,32], index: 13, kind: input, shape index: {}]
  %s14 = inlined_call_operand.vmem [shape: f32[2,1,32], index: 14, kind: input, shape index: {}]
  %s15 = inlined_call_operand.vmem [shape: bf16[32,256], index: 15, kind: input, shape index: {}]
  %s16 = inlined_call_operand.vmem [shape: f32[1,256], index: 16, kind: input, shape index: {}]
  %s17 = inlined_call_operand.vmem [shape: f32[8,512], index: 17, kind: output, shape index: {}]
  %s18 = sld [smem:[#allocation0]]
  $region109: #{torch_lm_forward.1} parent=0
    _
  %s20 = ssub.s32 1, %s18
  %s21 = scalar_select 0, %s20, %s18
  loop: start=0, step=1, limit=6
  $region2: #{torch_lm_forward.1} parent=0 // loop_pre_header
    _
  $region3: #{torch_lm_forward.1} parent=0 // loop_header
    %s23 = sphi 0, %s27
    %p24 = scmp.ge.s32.totalorder %s23, 6
    %s30 = sphi 0, %s42
    %s31 = sphi 0, %s38
    %s32 = sphi 0, %s30
    %s33 = sphi 0, %s31
    %s34 = sphi 0, %s32
    %s35 = sphi 0, %s33
    %s45 = sphi 0, %s47
    %s48 = sphi 0, %s45
    %s49 = sphi 0, %s48
    %s65 = sphi 0, %s49
    %s69 = sphi 0, %s69
    %s71 = sphi 0, %s69
    %s72 = sphi 0, %s71
    %s86 = sphi 0, %s72
    %s90 = sphi 0, %s90
    %s92 = sphi 0, %s90
    %s93 = sphi 0, %s92
    %s107 = sphi 0, %s93
    %s113 = sphi 0, %s115
    %s116 = sphi 0, %s113
    %s117 = sphi 0, %s116
    %s133 = sphi 0, %s117
    %s139 = sphi 0, %s141
    %s142 = sphi 0, %s139
    %s143 = sphi 0, %s142
    %s159 = sphi 0, %s143
    %s165 = sphi 0, %s167
    %s168 = sphi 0, %s165
    %s169 = sphi 0, %s168
    %s185 = sphi 0, %s169
    %s191 = sphi 0, %s193
    %s194 = sphi 0, %s191
    %s195 = sphi 0, %s194
    %s211 = sphi 0, %s195
    %s217 = sphi 0, %s219
    %s220 = sphi 0, %s217
    %s221 = sphi 0, %s220
    %s237 = sphi 0, %s221
    %s243 = sphi 0, %s245
    %s246 = sphi 0, %s243
    %s247 = sphi 0, %s246
    %s263 = sphi 0, %s247
    %s269 = sphi 0, %s271
    %s272 = sphi 0, %s269
    %s273 = sphi 0, %s272
    %s289 = sphi 0, %s273
    %s295 = sphi 0, %s297
    %s298 = sphi 0, %s295
    %s299 = sphi 0, %s298
    %s315 = sphi 0, %s299
    %s321 = sphi 0, %s323
    %s324 = sphi 0, %s321
    %s325 = sphi 0, %s324
    %s341 = sphi 0, %s325
    %s347 = sphi 0, %s349
    %s350 = sphi 0, %s347
    %s351 = sphi 0, %s350
    %s367 = sphi 0, %s351
    %s373 = sphi 0, %s375
    %s376 = sphi 0, %s373
    %s377 = sphi 0, %s376
    %s393 = sphi 0, %s377
    %s399 = sphi 0, %s401
    %s402 = sphi 0, %s399
    %s403 = sphi 0, %s402
    %s419 = sphi 0, %s403
    %s423 = sphi 0, %s423
    %s425 = sphi 0, %s423
    %s426 = sphi 0, %s425
    %s440 = sphi 0, %s426
    %s444 = sphi 0, %s444
    %s446 = sphi 0, %s444
    %s447 = sphi 0, %s446
    %s461 = sphi 0, %s447
    %s467 = sphi 0, %s469
    %s470 = sphi 0, %s467
    %s471 = sphi 0, %s470
    %s487 = sphi 0, %s471
  $region4: #{torch_lm_forward.1} parent=0 // loop_header_branch
    %26 = sbr.rel (%p24) target = $region8
  $region5: #{torch_lm_forward.1} parent=0 // loop_body
    %s28 = ssub.s32 %s23, 1
    %s29 = ssub.s32 %s23, 2
    %s36 = sadd.s32 1, %s31
    %p37 = scmp.ge.s32.totalorder %s36, 2
    %s38 = scalar_select %p37, 0, %s36
    %s39 = sadd.s32 1, %s30
    %s40 = scalar_select %p37, %s39, %s30
    %p41 = scmp.ge.s32.totalorder %s40, 2
    %s42 = scalar_select %p41, 0, %s40
    %s43 = ssub.s32 %s30, %s42
    %p44 = scmp.eq.s32.totalorder %s43, 0
    %s46 = sadd.s32 %s45, 1
    %s47 = scalar_select %p44, %s45, %s46
    %p50 = pneg %p44
    %p51 = scmp.eq.s32.totalorder %s23, 3
    %p52 = por %p50, %p51
    %p53 = scmp.ne.s32.totalorder %s45, %s48
    %p54 = scmp.eq.s32.totalorder %s23, 0
    %p55 = por %p53, %p54
    %p56 = scmp.ne.s32.totalorder %s45, %s48
    %p57 = scmp.eq.s32.totalorder %s28, 3
    %p58 = por %p56, %p57
    %p59 = scmp.ne.s32.totalorder %s48, %s49
    %p60 = scmp.eq.s32.totalorder %s28, 0
    %p61 = por %p59, %p60
    %p62 = scmp.ne.s32.totalorder %s48, %s49
    %p63 = scmp.eq.s32.totalorder %s29, 3
    %p64 = por %p62, %p63
    %p66 = scmp.ne.s32.totalorder %s49, %s65
    %p67 = scmp.eq.s32.totalorder %s29, 0
    %p68 = por %p66, %p67
    %s70 = sadd.s32 %s69, 1
    %p73 = scmp.eq.s32.totalorder %s23, 3
    %p74 = scmp.ne.s32.totalorder %s69, %s71
    %p75 = scmp.eq.s32.totalorder %s23, 0
    %p76 = por %p74, %p75
    %p77 = scmp.ne.s32.totalorder %s69, %s71
    %p78 = scmp.eq.s32.totalorder %s28, 3
    %p79 = por %p77, %p78
    %p80 = scmp.ne.s32.totalorder %s71, %s72
    %p81 = scmp.eq.s32.totalorder %s28, 0
    %p82 = por %p80, %p81
    %p83 = scmp.ne.s32.totalorder %s71, %s72
    %p84 = scmp.eq.s32.totalorder %s29, 3
    %p85 = por %p83, %p84
    %p87 = scmp.ne.s32.totalorder %s72, %s86
    %p88 = scmp.eq.s32.totalorder %s29, 0
    %p89 = por %p87, %p88
    %s91 = sadd.s32 %s90, 1
    %p94 = scmp.eq.s32.totalorder %s23, 3
    %p95 = scmp.ne.s32.totalorder %s90, %s92
    %p96 = scmp.eq.s32.totalorder %s23, 0
    %p97 = por %p95, %p96
    %p98 = scmp.ne.s32.totalorder %s90, %s92
    %p99 = scmp.eq.s32.totalorder %s28, 3
    %p100 = por %p98, %p99
    %p101 = scmp.ne.s32.totalorder %s92, %s93
    %p102 = scmp.eq.s32.totalorder %s28, 0
    %p103 = por %p101, %p102
    %p104 = scmp.ne.s32.totalorder %s92, %s93
    %p105 = scmp.eq.s32.totalorder %s29, 3
    %p106 = por %p104, %p105
    %p108 = scmp.ne.s32.totalorder %s93, %s107
    %p109 = scmp.eq.s32.totalorder %s29, 0
    %p110 = por %p108, %p109
    %s111 = ssub.s32 %s31, %s38
    %p112 = scmp.eq.s32.totalorder %s111, 0
    %s114 = sadd.s32 %s113, 1
    %s115 = scalar_select %p112, %s113, %s114
    %p118 = pneg %p112
    %p119 = scmp.eq.s32.totalorder %s23, 3
    %p120 = por %p118, %p119
    %p121 = scmp.ne.s32.totalorder %s113, %s116
    %p122 = scmp.eq.s32.totalorder %s23, 0
    %p123 = por %p121, %p122
    %p124 = scmp.ne.s32.totalorder %s113, %s116
    %p125 = scmp.eq.s32.totalorder %s28, 3
    %p126 = por %p124, %p125
    %p127 = scmp.ne.s32.totalorder %s116, %s117
    %p128 = scmp.eq.s32.totalorder %s28, 0
    %p129 = por %p127, %p128
    %p130 = scmp.ne.s32.totalorder %s116, %s117
    %p131 = scmp.eq.s32.totalorder %s29, 3
    %p132 = por %p130, %p131
    %p134 = scmp.ne.s32.totalorder %s117, %s133
    %p135 = scmp.eq.s32.totalorder %s29, 0
    %p136 = por %p134, %p135
    %s137 = ssub.s32 %s31, %s38
    %p138 = scmp.eq.s32.totalorder %s137, 0
    %s140 = sadd.s32 %s139, 1
    %s141 = scalar_select %p138, %s139, %s140
    %p144 = pneg %p138
    %p145 = scmp.eq.s32.totalorder %s23, 3
    %p146 = por %p144, %p145
    %p147 = scmp.ne.s32.totalorder %s139, %s142
    %p148 = scmp.eq.s32.totalorder %s23, 0
    %p149 = por %p147, %p148
    %p150 = scmp.ne.s32.totalorder %s139, %s142
    %p151 = scmp.eq.s32.totalorder %s28, 3
    %p152 = por %p150, %p151
    %p153 = scmp.ne.s32.totalorder %s142, %s143
    %p154 = scmp.eq.s32.totalorder %s28, 0
    %p155 = por %p153, %p154
    %p156 = scmp.ne.s32.totalorder %s142, %s143
    %p157 = scmp.eq.s32.totalorder %s29, 3
    %p158 = por %p156, %p157
    %p160 = scmp.ne.s32.totalorder %s143, %s159
    %p161 = scmp.eq.s32.totalorder %s29, 0
    %p162 = por %p160, %p161
    %s163 = ssub.s32 %s31, %s38
    %p164 = scmp.eq.s32.totalorder %s163, 0
    %s166 = sadd.s32 %s165, 1
    %s167 = scalar_select %p164, %s165, %s166
    %p170 = pneg %p164
    %p171 = scmp.eq.s32.totalorder %s23, 3
    %p172 = por %p170, %p171
    %p173 = scmp.ne.s32.totalorder %s165, %s168
    %p174 = scmp.eq.s32.totalorder %s23, 0
    %p175 = por %p173, %p174
    %p176 = scmp.ne.s32.totalorder %s165, %s168
    %p177 = scmp.eq.s32.totalorder %s28, 3
    %p178 = por %p176, %p177
    %p179 = scmp.ne.s32.totalorder %s168, %s169
    %p180 = scmp.eq.s32.totalorder %s28, 0
    %p181 = por %p179, %p180
    %p182 = scmp.ne.s32.totalorder %s168, %s169
    %p183 = scmp.eq.s32.totalorder %s29, 3
    %p184 = por %p182, %p183
    %p186 = scmp.ne.s32.totalorder %s169, %s185
    %p187 = scmp.eq.s32.totalorder %s29, 0
    %p188 = por %p186, %p187
    %s189 = ssub.s32 %s31, %s38
    %p190 = scmp.eq.s32.totalorder %s189, 0
    %s192 = sadd.s32 %s191, 1
    %s193 = scalar_select %p190, %s191, %s192
    %p196 = pneg %p190
    %p197 = scmp.eq.s32.totalorder %s23, 3
    %p198 = por %p196, %p197
    %p199 = scmp.ne.s32.totalorder %s191, %s194
    %p200 = scmp.eq.s32.totalorder %s23, 0
    %p201 = por %p199, %p200
    %p202 = scmp.ne.s32.totalorder %s191, %s194
    %p203 = scmp.eq.s32.totalorder %s28, 3
    %p204 = por %p202, %p203
    %p205 = scmp.ne.s32.totalorder %s194, %s195
    %p206 = scmp.eq.s32.totalorder %s28, 0
    %p207 = por %p205, %p206
    %p208 = scmp.ne.s32.totalorder %s194, %s195
    %p209 = scmp.eq.s32.totalorder %s29, 3
    %p210 = por %p208, %p209
    %p212 = scmp.ne.s32.totalorder %s195, %s211
    %p213 = scmp.eq.s32.totalorder %s29, 0
    %p214 = por %p212, %p213
    %s215 = ssub.s32 %s31, %s38
    %p216 = scmp.eq.s32.totalorder %s215, 0
    %s218 = sadd.s32 %s217, 1
    %s219 = scalar_select %p216, %s217, %s218
    %p222 = pneg %p216
    %p223 = scmp.eq.s32.totalorder %s23, 3
    %p224 = por %p222, %p223
    %p225 = scmp.ne.s32.totalorder %s217, %s220
    %p226 = scmp.eq.s32.totalorder %s23, 0
    %p227 = por %p225, %p226
    %p228 = scmp.ne.s32.totalorder %s217, %s220
    %p229 = scmp.eq.s32.totalorder %s28, 3
    %p230 = por %p228, %p229
    %p231 = scmp.ne.s32.totalorder %s220, %s221
    %p232 = scmp.eq.s32.totalorder %s28, 0
    %p233 = por %p231, %p232
    %p234 = scmp.ne.s32.totalorder %s220, %s221
    %p235 = scmp.eq.s32.totalorder %s29, 3
    %p236 = por %p234, %p235
    %p238 = scmp.ne.s32.totalorder %s221, %s237
    %p239 = scmp.eq.s32.totalorder %s29, 0
    %p240 = por %p238, %p239
    %s241 = ssub.s32 %s31, %s38
    %p242 = scmp.eq.s32.totalorder %s241, 0
    %s244 = sadd.s32 %s243, 1
    %s245 = scalar_select %p242, %s243, %s244
    %p248 = pneg %p242
    %p249 = scmp.eq.s32.totalorder %s23, 3
    %p250 = por %p248, %p249
    %p251 = scmp.ne.s32.totalorder %s243, %s246
    %p252 = scmp.eq.s32.totalorder %s23, 0
    %p253 = por %p251, %p252
    %p254 = scmp.ne.s32.totalorder %s243, %s246
    %p255 = scmp.eq.s32.totalorder %s28, 3
    %p256 = por %p254, %p255
    %p257 = scmp.ne.s32.totalorder %s246, %s247
    %p258 = scmp.eq.s32.totalorder %s28, 0
    %p259 = por %p257, %p258
    %p260 = scmp.ne.s32.totalorder %s246, %s247
    %p261 = scmp.eq.s32.totalorder %s29, 3
    %p262 = por %p260, %p261
    %p264 = scmp.ne.s32.totalorder %s247, %s263
    %p265 = scmp.eq.s32.totalorder %s29, 0
    %p266 = por %p264, %p265
    %s267 = ssub.s32 %s31, %s38
    %p268 = scmp.eq.s32.totalorder %s267, 0
    %s270 = sadd.s32 %s269, 1
    %s271 = scalar_select %p268, %s269, %s270
    %p274 = pneg %p268
    %p275 = scmp.eq.s32.totalorder %s23, 3
    %p276 = por %p274, %p275
    %p277 = scmp.ne.s32.totalorder %s269, %s272
    %p278 = scmp.eq.s32.totalorder %s23, 0
    %p279 = por %p277, %p278
    %p280 = scmp.ne.s32.totalorder %s269, %s272
    %p281 = scmp.eq.s32.totalorder %s28, 3
    %p282 = por %p280, %p281
    %p283 = scmp.ne.s32.totalorder %s272, %s273
    %p284 = scmp.eq.s32.totalorder %s28, 0
    %p285 = por %p283, %p284
    %p286 = scmp.ne.s32.totalorder %s272, %s273
    %p287 = scmp.eq.s32.totalorder %s29, 3
    %p288 = por %p286, %p287
    %p290 = scmp.ne.s32.totalorder %s273, %s289
    %p291 = scmp.eq.s32.totalorder %s29, 0
    %p292 = por %p290, %p291
    %s293 = ssub.s32 %s31, %s38
    %p294 = scmp.eq.s32.totalorder %s293, 0
    %s296 = sadd.s32 %s295, 1
    %s297 = scalar_select %p294, %s295, %s296
    %p300 = pneg %p294
    %p301 = scmp.eq.s32.totalorder %s23, 3
    %p302 = por %p300, %p301
    %p303 = scmp.ne.s32.totalorder %s295, %s298
    %p304 = scmp.eq.s32.totalorder %s23, 0
    %p305 = por %p303, %p304
    %p306 = scmp.ne.s32.totalorder %s295, %s298
    %p307 = scmp.eq.s32.totalorder %s28, 3
    %p308 = por %p306, %p307
    %p309 = scmp.ne.s32.totalorder %s298, %s299
    %p310 = scmp.eq.s32.totalorder %s28, 0
    %p311 = por %p309, %p310
    %p312 = scmp.ne.s32.totalorder %s298, %s299
    %p313 = scmp.eq.s32.totalorder %s29, 3
    %p314 = por %p312, %p313
    %p316 = scmp.ne.s32.totalorder %s299, %s315
    %p317 = scmp.eq.s32.totalorder %s29, 0
    %p318 = por %p316, %p317
    %s319 = ssub.s32 %s31, %s38
    %p320 = scmp.eq.s32.totalorder %s319, 0
    %s322 = sadd.s32 %s321, 1
    %s323 = scalar_select %p320, %s321, %s322
    %p326 = pneg %p320
    %p327 = scmp.eq.s32.totalorder %s23, 3
    %p328 = por %p326, %p327
    %p329 = scmp.ne.s32.totalorder %s321, %s324
    %p330 = scmp.eq.s32.totalorder %s23, 0
    %p331 = por %p329, %p330
    %p332 = scmp.ne.s32.totalorder %s321, %s324
    %p333 = scmp.eq.s32.totalorder %s28, 3
    %p334 = por %p332, %p333
    %p335 = scmp.ne.s32.totalorder %s324, %s325
    %p336 = scmp.eq.s32.totalorder %s28, 0
    %p337 = por %p335, %p336
    %p338 = scmp.ne.s32.totalorder %s324, %s325
    %p339 = scmp.eq.s32.totalorder %s29, 3
    %p340 = por %p338, %p339
    %p342 = scmp.ne.s32.totalorder %s325, %s341
    %p343 = scmp.eq.s32.totalorder %s29, 0
    %p344 = por %p342, %p343
    %s345 = ssub.s32 %s31, %s38
    %p346 = scmp.eq.s32.totalorder %s345, 0
    %s348 = sadd.s32 %s347, 1
    %s349 = scalar_select %p346, %s347, %s348
    %p352 = pneg %p346
    %p353 = scmp.eq.s32.totalorder %s23, 3
    %p354 = por %p352, %p353
    %p355 = scmp.ne.s32.totalorder %s347, %s350
    %p356 = scmp.eq.s32.totalorder %s23, 0
    %p357 = por %p355, %p356
    %p358 = scmp.ne.s32.totalorder %s347, %s350
    %p359 = scmp.eq.s32.totalorder %s28, 3
    %p360 = por %p358, %p359
    %p361 = scmp.ne.s32.totalorder %s350, %s351
    %p362 = scmp.eq.s32.totalorder %s28, 0
    %p363 = por %p361, %p362
    %p364 = scmp.ne.s32.totalorder %s350, %s351
    %p365 = scmp.eq.s32.totalorder %s29, 3
    %p366 = por %p364, %p365
    %p368 = scmp.ne.s32.totalorder %s351, %s367
    %p369 = scmp.eq.s32.totalorder %s29, 0
    %p370 = por %p368, %p369
    %s371 = ssub.s32 %s31, %s38
    %p372 = scmp.eq.s32.totalorder %s371, 0
    %s374 = sadd.s32 %s373, 1
    %s375 = scalar_select %p372, %s373, %s374
    %p378 = pneg %p372
    %p379 = scmp.eq.s32.totalorder %s23, 3
    %p380 = por %p378, %p379
    %p381 = scmp.ne.s32.totalorder %s373, %s376
    %p382 = scmp.eq.s32.totalorder %s23, 0
    %p383 = por %p381, %p382
    %p384 = scmp.ne.s32.totalorder %s373, %s376
    %p385 = scmp.eq.s32.totalorder %s28, 3
    %p386 = por %p384, %p385
    %p387 = scmp.ne.s32.totalorder %s376, %s377
    %p388 = scmp.eq.s32.totalorder %s28, 0
    %p389 = por %p387, %p388
    %p390 = scmp.ne.s32.totalorder %s376, %s377
    %p391 = scmp.eq.s32.totalorder %s29, 3
    %p392 = por %p390, %p391
    %p394 = scmp.ne.s32.totalorder %s377, %s393
    %p395 = scmp.eq.s32.totalorder %s29, 0
    %p396 = por %p394, %p395
    %s397 = ssub.s32 %s31, %s38
    %p398 = scmp.eq.s32.totalorder %s397, 0
    %s400 = sadd.s32 %s399, 1
    %s401 = scalar_select %p398, %s399, %s400
    %p404 = pneg %p398
    %p405 = scmp.eq.s32.totalorder %s23, 3
    %p406 = por %p404, %p405
    %p407 = scmp.ne.s32.totalorder %s399, %s402
    %p408 = scmp.eq.s32.totalorder %s23, 0
    %p409 = por %p407, %p408
    %p410 = scmp.ne.s32.totalorder %s399, %s402
    %p411 = scmp.eq.s32.totalorder %s28, 3
    %p412 = por %p410, %p411
    %p413 = scmp.ne.s32.totalorder %s402, %s403
    %p414 = scmp.eq.s32.totalorder %s28, 0
    %p415 = por %p413, %p414
    %p416 = scmp.ne.s32.totalorder %s402, %s403
    %p417 = scmp.eq.s32.totalorder %s29, 3
    %p418 = por %p416, %p417
    %p420 = scmp.ne.s32.totalorder %s403, %s419
    %p421 = scmp.eq.s32.totalorder %s29, 0
    %p422 = por %p420, %p421
    %s424 = sadd.s32 %s423, 1
    %p427 = scmp.eq.s32.totalorder %s23, 3
    %p428 = scmp.ne.s32.totalorder %s423, %s425
    %p429 = scmp.eq.s32.totalorder %s23, 0
    %p430 = por %p428, %p429
    %p431 = scmp.ne.s32.totalorder %s423, %s425
    %p432 = scmp.eq.s32.totalorder %s28, 3
    %p433 = por %p431, %p432
    %p434 = scmp.ne.s32.totalorder %s425, %s426
    %p435 = scmp.eq.s32.totalorder %s28, 0
    %p436 = por %p434, %p435
    %p437 = scmp.ne.s32.totalorder %s425, %s426
    %p438 = scmp.eq.s32.totalorder %s29, 3
    %p439 = por %p437, %p438
    %p441 = scmp.ne.s32.totalorder %s426, %s440
    %p442 = scmp.eq.s32.totalorder %s29, 0
    %p443 = por %p441, %p442
    %s445 = sadd.s32 %s444, 1
    %p448 = scmp.eq.s32.totalorder %s23, 3
    %p449 = scmp.ne.s32.totalorder %s444, %s446
    %p450 = scmp.eq.s32.totalorder %s23, 0
    %p451 = por %p449, %p450
    %p452 = scmp.ne.s32.totalorder %s444, %s446
    %p453 = scmp.eq.s32.totalorder %s28, 3
    %p454 = por %p452, %p453
    %p455 = scmp.ne.s32.totalorder %s446, %s447
    %p456 = scmp.eq.s32.totalorder %s28, 0
    %p457 = por %p455, %p456
    %p458 = scmp.ne.s32.totalorder %s446, %s447
    %p459 = scmp.eq.s32.totalorder %s29, 3
    %p460 = por %p458, %p459
    %p462 = scmp.ne.s32.totalorder %s447, %s461
    %p463 = scmp.eq.s32.totalorder %s29, 0
    %p464 = por %p462, %p463
    %s465 = ssub.s32 %s30, %s42
    %p466 = scmp.eq.s32.totalorder %s465, 0
    %s468 = sadd.s32 %s467, 1
    %s469 = scalar_select %p466, %s467, %s468
    %p472 = pneg %p466
    %p473 = scmp.eq.s32.totalorder %s23, 3
    %p474 = por %p472, %p473
    %p475 = scmp.ne.s32.totalorder %s467, %s470
    %p476 = scmp.eq.s32.totalorder %s23, 0
    %p477 = por %p475, %p476
    %p478 = scmp.ne.s32.totalorder %s467, %s470
    %p479 = scmp.eq.s32.totalorder %s28, 3
    %p480 = por %p478, %p479
    %p481 = scmp.ne.s32.totalorder %s470, %s471
    %p482 = scmp.eq.s32.totalorder %s28, 0
    %p483 = por %p481, %p482
    %p484 = scmp.ne.s32.totalorder %s470, %s471
    %p485 = scmp.eq.s32.totalorder %s29, 3
    %p486 = por %p484, %p485
    %p488 = scmp.ne.s32.totalorder %s471, %s487
    %p489 = scmp.eq.s32.totalorder %s29, 0
    %p490 = por %p488, %p489
    %p491 = scmp.le.s32.totalorder 1, %s23
    %p492 = scmp.lt.s32.totalorder %s23, 5
    %p493 = pnand %p491, %p492
    %p494 = pneg %p493
    // Predicated region
    $region9: #{torch_lm_forward.1} parent=5 // pred_check
      _
    $region10: #{torch_lm_forward.1} parent=5 // pred_check_branch
      %496 = sbr.rel (%p493) target = $region12
    $region11: #{torch_lm_forward.1} parent=5 // pred_region
      %s497 = ssub.s32 %s23, 1
      // Predicated region
      $region13: #{torch_lm_forward.1} parent=11 // pred_check
        %p498 = pneg %p82
      $region14: #{torch_lm_forward.1} parent=11 // pred_check_branch
        %500 = sbr.rel (%p498) target = $region16
      $region15: #{torch_lm_forward.1} parent=11 // pred_region
        _
      $region16: #{torch_lm_forward.1} parent=11 // pred_fallthru
        _
      // Predicated region
      $region17: #{torch_lm_forward.1} parent=11 // pred_check
        %p501 = pneg %p103
      $region18: #{torch_lm_forward.1} parent=11 // pred_check_branch
        %503 = sbr.rel (%p501) target = $region20
      $region19: #{torch_lm_forward.1} parent=11 // pred_region
        _
      $region20: #{torch_lm_forward.1} parent=11 // pred_fallthru
        _
      // Predicated region
      $region21: #{torch_lm_forward.1} parent=11 // pred_check
        %p504 = pneg %p436
      $region22: #{torch_lm_forward.1} parent=11 // pred_check_branch
        %506 = sbr.rel (%p504) target = $region24
      $region23: #{torch_lm_forward.1} parent=11 // pred_region
        _
      $region24: #{torch_lm_forward.1} parent=11 // pred_fallthru
        _
      // Predicated region
      $region25: #{torch_lm_forward.1} parent=11 // pred_check
        %p507 = pneg %p457
      $region26: #{torch_lm_forward.1} parent=11 // pred_check_branch
        %509 = sbr.rel (%p507) target = $region28
      $region27: #{torch_lm_forward.1} parent=11 // pred_region
        _
      $region28: #{torch_lm_forward.1} parent=11 // pred_fallthru
        _
    $region12: #{torch_lm_forward.1} parent=5 // pred_fallthru
      _
    %p510 = scmp.lt.s32.totalorder %s23, 4
    // Predicated region
    $region29: #{torch_lm_forward.1} parent=5 // pred_check
      %p511 = pneg %p510
    $region30: #{torch_lm_forward.1} parent=5 // pred_check_branch
      %513 = sbr.rel (%p511) target = $region32
    $region31: #{torch_lm_forward.1} parent=5 // pred_region
      // Predicated region
      $region33: #{torch_lm_forward.1} parent=31 // pred_check
        %p514 = pneg %p55
      $region34: #{torch_lm_forward.1} parent=31 // pred_check_branch
        %516 = sbr.rel (%p514) target = $region36
      $region35: #{torch_lm_forward.1} parent=31 // pred_region
        %p517 = scmp.lt.s32.totalorder %s30, 1
        %s518 = scalar_select %p517, %s30, 1
        %s519 = smul.addr %s518, 8
        %s520 = scalar_lea.vmem %s0, %s519
      $region36: #{torch_lm_forward.1} parent=31 // pred_fallthru
        _
      // Predicated region
      $region37: #{torch_lm_forward.1} parent=31 // pred_check
        %p521 = pneg %p123
      $region38: #{torch_lm_forward.1} parent=31 // pred_check_branch
        %523 = sbr.rel (%p521) target = $region40
      $region39: #{torch_lm_forward.1} parent=31 // pred_region
        %p524 = scmp.lt.s32.totalorder %s31, 1
        %s525 = scalar_select %p524, %s31, 1
        %s526 = scalar_lea.vmem %s3, %s525
      $region40: #{torch_lm_forward.1} parent=31 // pred_fallthru
        _
      // Predicated region
      $region41: #{torch_lm_forward.1} parent=31 // pred_check
        %p527 = pneg %p149
      $region42: #{torch_lm_forward.1} parent=31 // pred_check_branch
        %529 = sbr.rel (%p527) target = $region44
      $region43: #{torch_lm_forward.1} parent=31 // pred_region
        %p530 = scmp.lt.s32.totalorder %s31, 1
        %s531 = scalar_select %p530, %s31, 1
        %s532 = scalar_lea.vmem %s4, %s531
      $region44: #{torch_lm_forward.1} parent=31 // pred_fallthru
        _
      // Predicated region
      $region45: #{torch_lm_forward.1} parent=31 // pred_check
        %p533 = pneg %p175
      $region46: #{torch_lm_forward.1} parent=31 // pred_check_branch
        %535 = sbr.rel (%p533) target = $region48
      $region47: #{torch_lm_forward.1} parent=31 // pred_region
        %p536 = scmp.lt.s32.totalorder %s31, 1
        %s537 = scalar_select %p536, %s31, 1
        %s538 = smul.addr %s537, 4
        %s539 = smul.addr %s538, 4
        %s540 = scalar_lea.vmem %s5, %s539
      $region48: #{torch_lm_forward.1} parent=31 // pred_fallthru
        _
      // Predicated region
      $region49: #{torch_lm_forward.1} parent=31 // pred_check
        %p541 = pneg %p201
      $region50: #{torch_lm_forward.1} parent=31 // pred_check_branch
        %543 = sbr.rel (%p541) target = $region52
      $region51: #{torch_lm_forward.1} parent=31 // pred_region
        %p544 = scmp.lt.s32.totalorder %s31, 1
        %s545 = scalar_select %p544, %s31, 1
        %s546 = scalar_lea.vmem %s6, %s545
      $region52: #{torch_lm_forward.1} parent=31 // pred_fallthru
        _
      // Predicated region
      $region53: #{torch_lm_forward.1} parent=31 // pred_check
        %p547 = pneg %p227
      $region54: #{torch_lm_forward.1} parent=31 // pred_check_branch
        %549 = sbr.rel (%p547) target = $region56
      $region55: #{torch_lm_forward.1} parent=31 // pred_region
        %p550 = scmp.lt.s32.totalorder %s31, 1
        %s551 = scalar_select %p550, %s31, 1
        %s552 = smul.addr %s551, 4
        %s553 = smul.addr %s552, 4
        %s554 = scalar_lea.vmem %s7, %s553
      $region56: #{torch_lm_forward.1} parent=31 // pred_fallthru
        _
      // Predicated region
      $region57: #{torch_lm_forward.1} parent=31 // pred_check
        %p555 = pneg %p253
      $region58: #{torch_lm_forward.1} parent=31 // pred_check_branch
        %557 = sbr.rel (%p555) target = $region60
      $region59: #{torch_lm_forward.1} parent=31 // pred_region
        %p558 = scmp.lt.s32.totalorder %s31, 1
        %s559 = scalar_select %p558, %s31, 1
        %s560 = scalar_lea.vmem %s8, %s559
      $region60: #{torch_lm_forward.1} parent=31 // pred_fallthru
        _
      // Predicated region
      $region61: #{torch_lm_forward.1} parent=31 // pred_check
        %p561 = pneg %p279
      $region62: #{torch_lm_forward.1} parent=31 // pred_check_branch
        %563 = sbr.rel (%p561) target = $region64
      $region63: #{torch_lm_forward.1} parent=31 // pred_region
        %p564 = scmp.lt.s32.totalorder %s31, 1
        %s565 = scalar_select %p564, %s31, 1
        %s566 = scalar_lea.vmem %s9, %s565
      $region64: #{torch_lm_forward.1} parent=31 // pred_fallthru
        _
      // Predicated region
      $region65: #{torch_lm_forward.1} parent=31 // pred_check
        %p567 = pneg %p305
      $region66: #{torch_lm_forward.1} parent=31 // pred_check_branch
        %569 = sbr.rel (%p567) target = $region68
      $region67: #{torch_lm_forward.1} parent=31 // pred_region
        %p570 = scmp.lt.s32.totalorder %s31, 1
        %s571 = scalar_select %p570, %s31, 1
        %s572 = scalar_lea.vmem %s10, %s571
      $region68: #{torch_lm_forward.1} parent=31 // pred_fallthru
        _
      // Predicated region
      $region69: #{torch_lm_forward.1} parent=31 // pred_check
        %p573 = pneg %p331
      $region70: #{torch_lm_forward.1} parent=31 // pred_check_branch
        %575 = sbr.rel (%p573) target = $region72
      $region71: #{torch_lm_forward.1} parent=31 // pred_region
        %p576 = scmp.lt.s32.totalorder %s31, 1
        %s577 = scalar_select %p576, %s31, 1
        %s578 = smul.addr %s577, 4
        %s579 = smul.addr %s578, 4
        %s580 = scalar_lea.vmem %s11, %s579
      $region72: #{torch_lm_forward.1} parent=31 // pred_fallthru
        _
      // Predicated region
      $region73: #{torch_lm_forward.1} parent=31 // pred_check
        %p581 = pneg %p357
      $region74: #{torch_lm_forward.1} parent=31 // pred_check_branch
        %583 = sbr.rel (%p581) target = $region76
      $region75: #{torch_lm_forward.1} parent=31 // pred_region
        %p584 = scmp.lt.s32.totalorder %s31, 1
        %s585 = scalar_select %p584, %s31, 1
        %s586 = scalar_lea.vmem %s12, %s585
      $region76: #{torch_lm_forward.1} parent=31 // pred_fallthru
        _
      // Predicated region
      $region77: #{torch_lm_forward.1} parent=31 // pred_check
        %p587 = pneg %p383
      $region78: #{torch_lm_forward.1} parent=31 // pred_check_branch
        %589 = sbr.rel (%p587) target = $region80
      $region79: #{torch_lm_forward.1} parent=31 // pred_region
        %p590 = scmp.lt.s32.totalorder %s31, 1
        %s591 = scalar_select %p590, %s31, 1
        %s592 = smul.addr %s591, 8
        %s593 = smul.addr %s592, 4
        %s594 = scalar_lea.vmem %s13, %s593
      $region80: #{torch_lm_forward.1} parent=31 // pred_fallthru
        _
      // Predicated region
      $region81: #{torch_lm_forward.1} parent=31 // pred_check
        %p595 = pneg %p409
      $region82: #{torch_lm_forward.1} parent=31 // pred_check_branch
        %597 = sbr.rel (%p595) target = $region84
      $region83: #{torch_lm_forward.1} parent=31 // pred_region
        %p598 = scmp.lt.s32.totalorder %s31, 1
        %s599 = scalar_select %p598, %s31, 1
        %s600 = scalar_lea.vmem %s14, %s599
      $region84: #{torch_lm_forward.1} parent=31 // pred_fallthru
        _
    $region32: #{torch_lm_forward.1} parent=5 // pred_fallthru
      _
    %p601 = scmp.le.s32.totalorder 1, %s23
    %p602 = scmp.lt.s32.totalorder %s23, 5
    %p603 = pnand %p601, %p602
    %p604 = pneg %p603
    // Predicated region
    $region85: #{torch_lm_forward.1} parent=5 // pred_check
      _
    $region86: #{torch_lm_forward.1} parent=5 // pred_check_branch
      %606 = sbr.rel (%p603) target = $region88
    $region87: #{torch_lm_forward.1} parent=5 // pred_region
      %s607 = ssub.s32 %s23, 1
      %p608 = scmp.lt.s32.totalorder %s32, 1
      %s609 = scalar_select %p608, %s32, 1
      %s610 = smul.addr %s609, 8
      %s611 = scalar_lea.vmem %s0, %s610
      %p612 = pneg %p61
      %p613 = pneg %p58
      %p614 = pneg %p82
      %p615 = pneg %p79
      %p616 = pneg %p103
      %p617 = pneg %p100
      %p618 = scmp.lt.s32.totalorder %s33, 1
      %s619 = scalar_select %p618, %s33, 1
      %s620 = scalar_lea.vmem %s3, %s619
      %p621 = pneg %p129
      %p622 = pneg %p126
      %p623 = scmp.lt.s32.totalorder %s33, 1
      %s624 = scalar_select %p623, %s33, 1
      %s625 = scalar_lea.vmem %s4, %s624
      %p626 = pneg %p155
      %p627 = pneg %p152
      %p628 = scmp.lt.s32.totalorder %s33, 1
      %s629 = scalar_select %p628, %s33, 1
      %s630 = smul.addr %s629, 4
      %s631 = smul.addr %s630, 4
      %s632 = scalar_lea.vmem %s5, %s631
      %p633 = pneg %p181
      %p634 = pneg %p178
      %p635 = scmp.lt.s32.totalorder %s33, 1
      %s636 = scalar_select %p635, %s33, 1
      %s637 = scalar_lea.vmem %s6, %s636
      %p638 = pneg %p207
      %p639 = pneg %p204
      %p640 = scmp.lt.s32.totalorder %s33, 1
      %s641 = scalar_select %p640, %s33, 1
      %s642 = smul.addr %s641, 4
      %s643 = smul.addr %s642, 4
      %s644 = scalar_lea.vmem %s7, %s643
      %p645 = pneg %p233
      %p646 = pneg %p230
      %p647 = scmp.lt.s32.totalorder %s33, 1
      %s648 = scalar_select %p647, %s33, 1
      %s649 = scalar_lea.vmem %s8, %s648
      %p650 = pneg %p259
      %p651 = pneg %p256
      %p652 = scmp.lt.s32.totalorder %s33, 1
      %s653 = scalar_select %p652, %s33, 1
      %s654 = scalar_lea.vmem %s9, %s653
      %p655 = pneg %p285
      %p656 = pneg %p282
      %p657 = scmp.lt.s32.totalorder %s33, 1
      %s658 = scalar_select %p657, %s33, 1
      %s659 = scalar_lea.vmem %s10, %s658
      %p660 = pneg %p311
      %p661 = pneg %p308
      %p662 = scmp.lt.s32.totalorder %s33, 1
      %s663 = scalar_select %p662, %s33, 1
      %s664 = smul.addr %s663, 4
      %s665 = smul.addr %s664, 4
      %s666 = scalar_lea.vmem %s11, %s665
      %p667 = pneg %p337
      %p668 = pneg %p334
      %p669 = scmp.lt.s32.totalorder %s33, 1
      %s670 = scalar_select %p669, %s33, 1
      %s671 = scalar_lea.vmem %s12, %s670
      %p672 = pneg %p363
      %p673 = pneg %p360
      %p674 = scmp.lt.s32.totalorder %s33, 1
      %s675 = scalar_select %p674, %s33, 1
      %s676 = smul.addr %s675, 8
      %s677 = smul.addr %s676, 4
      %s678 = scalar_lea.vmem %s13, %s677
      %p679 = pneg %p389
      %p680 = pneg %p386
      %p681 = scmp.lt.s32.totalorder %s33, 1
      %s682 = scalar_select %p681, %s33, 1
      %s683 = scalar_lea.vmem %s14, %s682
      %p684 = pneg %p415
      %p685 = pneg %p412
      %p686 = pneg %p436
      %p687 = pneg %p433
      %p688 = pneg %p457
      %p689 = pneg %p454
      %p690 = pneg %p483
      %p691 = pneg %p480
      %s692 = smul.u32 2, %s32
      %p693 = scmp.lt.s32.totalorder %s692, 3
      %s694 = scalar_select %p693, %s692, 3
      %s695 = smul.addr %s694, 8
      %s696 = scalar_lea.vmem %s17, %s695
      %p697 = scmp.lt.s32.totalorder %s32, 1
      %s698 = scalar_select %p697, %s32, 1
      %s699 = smul.addr %s698, 8
      %s700 = scalar_lea.vmem %s0, %s699
      %p701 = scmp.lt.s32.totalorder %s33, 1
      %s702 = scalar_select %p701, %s33, 1
      %s703 = scalar_lea.vmem %s3, %s702
      %p704 = scmp.lt.s32.totalorder %s33, 1
      %s705 = scalar_select %p704, %s33, 1
      %s706 = scalar_lea.vmem %s4, %s705
      %p707 = scmp.lt.s32.totalorder %s33, 1
      %s708 = scalar_select %p707, %s33, 1
      %s709 = smul.addr %s708, 4
      %s710 = smul.addr %s709, 4
      %s711 = scalar_lea.vmem %s5, %s710
      %p712 = scmp.lt.s32.totalorder %s33, 1
      %s713 = scalar_select %p712, %s33, 1
      %s714 = scalar_lea.vmem %s6, %s713
      %p715 = scmp.lt.s32.totalorder %s33, 1
      %s716 = scalar_select %p715, %s33, 1
      %s717 = smul.addr %s716, 4
      %s718 = smul.addr %s717, 4
      %s719 = scalar_lea.vmem %s7, %s718
      %p720 = scmp.lt.s32.totalorder %s33, 1
      %s721 = scalar_select %p720, %s33, 1
      %s722 = scalar_lea.vmem %s8, %s721
      %p723 = scmp.lt.s32.totalorder %s33, 1
      %s724 = scalar_select %p723, %s33, 1
      %s725 = scalar_lea.vmem %s9, %s724
      %p726 = scmp.lt.s32.totalorder %s33, 1
      %s727 = scalar_select %p726, %s33, 1
      %s728 = scalar_lea.vmem %s10, %s727
      %p729 = scmp.lt.s32.totalorder %s33, 1
      %s730 = scalar_select %p729, %s33, 1
      %s731 = smul.addr %s730, 4
      %s732 = smul.addr %s731, 4
      %s733 = scalar_lea.vmem %s11, %s732
      %p734 = scmp.lt.s32.totalorder %s33, 1
      %s735 = scalar_select %p734, %s33, 1
      %s736 = scalar_lea.vmem %s12, %s735
      %p737 = scmp.lt.s32.totalorder %s33, 1
      %s738 = scalar_select %p737, %s33, 1
      %s739 = smul.addr %s738, 8
      %s740 = smul.addr %s739, 4
      %s741 = scalar_lea.vmem %s13, %s740
      %p742 = scmp.lt.s32.totalorder %s33, 1
      %s743 = scalar_select %p742, %s33, 1
      %s744 = scalar_lea.vmem %s14, %s743
      %s745 = smul.u32 2, %s32
      %p746 = scmp.lt.s32.totalorder %s745, 3
      %s747 = scalar_select %p746, %s745, 3
      %s748 = smul.addr %s747, 8
      %s749 = scalar_lea.vmem %s17, %s748
      %s750 = smul.u32 2, %s32
      %p752 = scmp.eq.s32.totalorder %s33, 0
      // Predicated region
      $region89: #{torch_lm_forward.1} parent=87 // pred_check
        %p753 = pneg %p752
      $region90: #{torch_lm_forward.1} parent=87 // pred_check_branch
        %755 = sbr.rel (%p753) target = $region92
      $region91: #{torch_lm_forward.1} parent=87 // pred_region
        %v756 = vld [vmem:[%s700] sm:$0xff]
        %v757 = vlaneseq
        %v758 = vand.u32 %v757, 127
        %v759 = vadd.s32 %v758, 128
        %760 = vset.pattern.permute.xlu0 0
        %761 = vperm.xlu0 %760, %v756
        %v762 = vpop.permute.xlu0 %761
        %vm763 = vcmp.eq.s32.totalorder %v758, %v762
        %vm764 = vcmp.eq.s32.totalorder %v759, %v762
        %v765 = vsel %vm763, 1, 0
        %v766 = vsel %vm764, 1, 0
        %v767 = vcvt.s32.f32 %v765
        %v768 = vcvt.s32.f32 %v766
        %v769 = vpack.c.bf16 %v767, %v767
        %v770 = vpack.c.bf16 %v768, %v768
        %v771 = vld [vmem:[%s1] sm:$0xf]
        %v772 = vld [vmem:[%s1 + $0x4] sm:$0xf]
        %v773 = vld [vmem:[%s1 + $0x8] sm:$0xf]
        %v774 = vld [vmem:[%s1 + $0xc] sm:$0xf]
        %v775 = vld [vmem:[%s1 + $0x10] sm:$0xf]
        %v776 = vld [vmem:[%s1 + $0x14] sm:$0xf]
        %v777 = vld [vmem:[%s1 + $0x18] sm:$0xf]
        %v778 = vld [vmem:[%s1 + $0x1c] sm:$0xf]
        %v779 = vld [vmem:[%s1 + $0x20] sm:$0xf]
        %v780 = vld [vmem:[%s1 + $0x24] sm:$0xf]
        %v781 = vld [vmem:[%s1 + $0x28] sm:$0xf]
        %v782 = vld [vmem:[%s1 + $0x2c] sm:$0xf]
        %v783 = vld [vmem:[%s1 + $0x30] sm:$0xf]
        %v784 = vld [vmem:[%s1 + $0x34] sm:$0xf]
        %v785 = vld [vmem:[%s1 + $0x38] sm:$0xf]
        %v786 = vld [vmem:[%s1 + $0x3c] sm:$0xf]
        %v787 = vld [vmem:[%s1 + $0x40] sm:$0xf]
        %v788 = vld [vmem:[%s1 + $0x44] sm:$0xf]
        %v789 = vld [vmem:[%s1 + $0x48] sm:$0xf]
        %v790 = vld [vmem:[%s1 + $0x4c] sm:$0xf]
        %v791 = vld [vmem:[%s1 + $0x50] sm:$0xf]
        %v792 = vld [vmem:[%s1 + $0x54] sm:$0xf]
        %v793 = vld [vmem:[%s1 + $0x58] sm:$0xf]
        %v794 = vld [vmem:[%s1 + $0x5c] sm:$0xf]
        %v795 = vld [vmem:[%s1 + $0x60] sm:$0xf]
        %v796 = vld [vmem:[%s1 + $0x64] sm:$0xf]
        %v797 = vld [vmem:[%s1 + $0x68] sm:$0xf]
        %v798 = vld [vmem:[%s1 + $0x6c] sm:$0xf]
        %v799 = vld [vmem:[%s1 + $0x70] sm:$0xf]
        %v800 = vld [vmem:[%s1 + $0x74] sm:$0xf]
        %v801 = vld [vmem:[%s1 + $0x78] sm:$0xf]
        %v802 = vld [vmem:[%s1 + $0x7c] sm:$0xf]
        %v803 = vld [vmem:[%s2] sm:$0xff]
        %v836 = vunpack.c.l.b16 %v771
        %v837 = vunpack.c.l.b16 %v772
        %v838 = vunpack.c.l.b16 %v773
        %v839 = vunpack.c.l.b16 %v774
        %v840 = vunpack.c.l.b16 %v775
        %v841 = vunpack.c.l.b16 %v776
        %v842 = vunpack.c.l.b16 %v777
        %v843 = vunpack.c.l.b16 %v778
        %v844 = vunpack.c.l.b16 %v779
        %v845 = vunpack.c.l.b16 %v780
        %v846 = vunpack.c.l.b16 %v781
        %v847 = vunpack.c.l.b16 %v782
        %v848 = vunpack.c.l.b16 %v783
        %v849 = vunpack.c.l.b16 %v784
        %v850 = vunpack.c.l.b16 %v785
        %v851 = vunpack.c.l.b16 %v786
        %v852 = vunpack.c.l.b16 %v787
        %v853 = vunpack.c.l.b16 %v788
        %v854 = vunpack.c.l.b16 %v789
        %v855 = vunpack.c.l.b16 %v790
        %v856 = vunpack.c.l.b16 %v791
        %v857 = vunpack.c.l.b16 %v792
        %v858 = vunpack.c.l.b16 %v793
        %v859 = vunpack.c.l.b16 %v794
        %v860 = vunpack.c.l.b16 %v795
        %v861 = vunpack.c.l.b16 %v796
        %v862 = vunpack.c.l.b16 %v797
        %v863 = vunpack.c.l.b16 %v798
        %v864 = vunpack.c.l.b16 %v799
        %v865 = vunpack.c.l.b16 %v800
        %v866 = vunpack.c.l.b16 %v801
        %v867 = vunpack.c.l.b16 %v802
        %v868 = vpack.c.b16 %v837, %v836
        %v869 = vpack.c.b16 %v839, %v838
        %v870 = vpack.c.b16 %v841, %v840
        %v871 = vpack.c.b16 %v843, %v842
        %v872 = vpack.c.b16 %v845, %v844
        %v873 = vpack.c.b16 %v847, %v846
        %v874 = vpack.c.b16 %v849, %v848
        %v875 = vpack.c.b16 %v851, %v850
        %v876 = vpack.c.b16 %v853, %v852
        %v877 = vpack.c.b16 %v855, %v854
        %v878 = vpack.c.b16 %v857, %v856
        %v879 = vpack.c.b16 %v859, %v858
        %v880 = vpack.c.b16 %v861, %v860
        %v881 = vpack.c.b16 %v863, %v862
        %v882 = vpack.c.b16 %v865, %v864
        %v883 = vpack.c.b16 %v867, %v866
        %900 = vmatpush.bf16.msra.mxu0 %v875
        %901 = vmatpush.bf16.msra.mxu0 %v874
        %902 = vmatpush.bf16.msra.mxu0 %v873
        %903 = vmatpush.bf16.msra.mxu0 %v872
        %904 = vmatpush.bf16.msra.mxu0 %v871
        %905 = vmatpush.bf16.msra.mxu0 %v870
        %906 = vmatpush.bf16.msra.mxu0 %v869
        %907 = vmatpush.bf16.msra.mxu0 %v868
        %908 = vmatmul.bf16.gmra.mxu0 %v769
        %v909 = vpop.f32.mrf.mxu0
        %v910 = vadd.f32 %v803, %v909
        %v911 = vpop.f32.mrf.mxu0
        %912 = vdwg.mxu0
        %913 = vmatpush.bf16.msra.mxu0 %v883
        %914 = vmatpush.bf16.msra.mxu0 %v882
        %915 = vmatpush.bf16.msra.mxu0 %v881
        %916 = vmatpush.bf16.msra.mxu0 %v880
        %917 = vmatpush.bf16.msra.mxu0 %v879
        %918 = vmatpush.bf16.msra.mxu0 %v878
        %919 = vmatpush.bf16.msra.mxu0 %v877
        %920 = vmatpush.bf16.msra.mxu0 %v876
        %921 = vmatmul.bf16.gmra.mxu0 %v770
        %v922 = vpop.f32.mrf.mxu0
        %v923 = vadd.f32 %v910, %v922
        %v924 = vpop.f32.mrf.mxu0
        %925 = vdwg.mxu0
        %vm926 = vcmask 261120
        %927 = vst.msk [vmem:[#allocation2] sm:$0xff] %vm926, %v923
        %v928 = vlaneseq
        %v929 = vshrl.u32 %v928, 7
        %vm930 = vcmp.gt.s32.totalorder %v758, %v929
        %v931 = vsel %vm930, -1e+30, 0.0
        %vm932 = vcmask 64512
        %933 = vst.msk [vmem:[#allocation3] sm:$0xff] %vm932, %v931
      $region92: #{torch_lm_forward.1} parent=87 // pred_fallthru
        _
      %v934 = vld [vmem:[#allocation2] sm:$0xff]
      %v935 = vld [vmem:[#allocation3] sm:$0xff]
      %v936 = vld [vmem:[%s703] sm:$0x1]
      %v937 = vld [vmem:[%s706] sm:$0x1]
      %vm938 = vcmask 261120
      %v939 = vsel %vm938, %v934, 0.0
      %940 = vadd.xlane.f32.xlu0 %v939
      %v941 = vpop.xlane.xlu0 %940
      %v942 = vrcp.pop 32.0
      %v943 = vmul.f32 32.0, %v942
      %v944 = vsub.f32 1.0, %v943
      %v945 = vmul.f32 %v942, %v944
      %v946 = vadd.f32 %v942, %v945
      %vm947 = vweird.f32 %v942
      %v948 = vsel %vm947, %v942, %v946
      %v949 = vmul.f32 %v941, %v948
      %v950 = vsub.f32 %v934, %v949
      %v951 = vmul.f32 %v950, %v950
      %v952 = vsel %vm938, %v951, 0.0
      %953 = vadd.xlane.f32.xlu0 %v952
      %v954 = vpop.xlane.xlu0 %953
      %v955 = vmul.f32 %v954, %v948
      %v956 = vadd.f32 %v955, 1e-05
      %v957 = vrsqrt.pop %v956
      %v958 = vmul.f32 %v957, %v956
      %v959 = vmul.f32 %v958, %v957
      %v960 = vmul.f32 0.5, %v959
      %v961 = vsub.f32 1.5, %v960
      %v962 = vmul.f32 %v957, %v961
      %vm963 = vweird.f32 %v956
      %vm964 = vweird.f32 %v957
      %vm965 = vmor %vm963, %vm964
      %v966 = vsel %vm965, %v957, %v962
      %v967 = vmul.f32 %v950, %v966
      %v969 = vperm.slane %v936, 0
      %v971 = vmul.f32 %v967, %v969
      %v973 = vperm.slane %v937, 0
      %v975 = vadd.f32 %v971, %v973
      %v976 = vpack.c.bf16 %v975, %v975
      %v977 = vld [vmem:[%s711] sm:$0xf]
      %v978 = vld [vmem:[%s711 + $0x4] sm:$0xf]
      %v979 = vld [vmem:[%s711 + $0x8] sm:$0xf]
      %v980 = vld [vmem:[%s711 + $0xc] sm:$0xf]
      %v981 = vld [vmem:[%s714] sm:$0x1]
      %v983 = vperm.slane %v981, 0
      %v989 = vunpack.c.l.b16 %v977
      %v990 = vunpack.c.l.b16 %v978
      %v991 = vunpack.c.l.b16 %v979
      %v992 = vunpack.c.l.b16 %v980
      %v993 = vpack.c.b16 %v990, %v989
      %v994 = vpack.c.b16 %v992, %v991
      %v998 = vsel %vm938, %v976, 0
      %1000 = vmatpush.bf16.msra.mxu0 0
      %1001 = vmatpush.bf16.msra.mxu0 0
      %1002 = vmatpush.bf16.msra.mxu0 0
      %1003 = vmatpush.bf16.msra.mxu0 0
      %1004 = vmatpush.bf16.msra.mxu0 0
      %1005 = vmatpush.bf16.msra.mxu0 0
      %1006 = vmatpush.bf16.msra.mxu0 %v994
      %1007 = vmatpush.bf16.msra.mxu0 %v993
      %1008 = vmatmul.bf16.gmra.mxu0 %v998
      %v1009 = vpop.f32.mrf.mxu0
      %v1010 = vadd.f32 %v983, %v1009
      %v1011 = vpop.f32.mrf.mxu0
      %1012 = vdwg.mxu0
      %v1013 = vpack.c.bf16 %v1010, %v1010
      %1015 = vrot.lane.b32.xlu0 %v1013, 96
      %v1016 = vpop.permute.xlu0 %1015
      %vm1017 = vcmask 64512
      %v1019 = vsel %vm1017, %v1013, 0
      %v1022 = vsel %vm1017, %v1016, 0
      %1024 = vmatpush.bf16.xpose.msra.mxu0 0
      %1025 = vmatpush.bf16.xpose.msra.mxu0 0
      %1026 = vmatpush.bf16.xpose.msra.mxu0 0
      %1027 = vmatpush.bf16.xpose.msra.mxu0 0
      %1028 = vmatpush.bf16.xpose.msra.mxu0 0
      %1029 = vmatpush.bf16.xpose.msra.mxu0 0
      %1030 = vmatpush.bf16.xpose.msra.mxu0 0
      %1031 = vmatpush.bf16.xpose.msra.mxu0 %v1022
      %1032 = vmatmul.bf16.gmra.mxu0 %v1019
      %v1033 = vpop.f32.mrf.mxu0
      %v1034 = vadd.f32 %v935, %v1033
      %v1035 = vpop.f32.mrf.mxu0
      %1036 = vdwg.mxu0
      %v1037 = vsel %vm1017, %v1034, -inf
      %1038 = vmax.xlane.f32.xlu0 %v1037
      %v1039 = vpop.xlane.xlu0 %1038
      %v1040 = vsub.f32 %v1034, %v1039
      %v1041 = vmul.f32 %v1040, 1.442695
      %v1042 = vpow.pop %v1041
      %v1043 = vsel %vm1017, %v1042, 0.0
      %1044 = vadd.xlane.f32.xlu0 %v1043
      %v1045 = vpop.xlane.xlu0 %1044
      %v1046 = vrcp.pop %v1045
      %v1047 = vmul.f32 %v1042, %v1046
      %v1048 = vpack.c.bf16 %v1047, %v1047
      %1049 = vrot.lane.b32.xlu0 %v1013, 64
      %v1050 = vpop.permute.xlu0 %1049
      %v1052 = vsel %vm1017, %v1048, 0
      %vm1054 = vcmask 1043456
      %v1056 = vsel %vm1054, %v1050, 0
      %1058 = vmatpush.bf16.msra.mxu0 0
      %1059 = vmatpush.bf16.msra.mxu0 0
      %1060 = vmatpush.bf16.msra.mxu0 0
      %1061 = vmatpush.bf16.msra.mxu0 0
      %1062 = vmatpush.bf16.msra.mxu0 0
      %1063 = vmatpush.bf16.msra.mxu0 0
      %1064 = vmatpush.bf16.msra.mxu0 0
      %1065 = vmatpush.bf16.msra.mxu0 %v1056
      %1066 = vmatmul.bf16.gmra.mxu0 %v1052
      %v1067 = vpop.f32.mrf.mxu0
      %v1068 = vadd.f32 0.0, %v1067
      %v1069 = vpop.f32.mrf.mxu0
      %1070 = vdwg.mxu0
      %1071 = vrot.lane.b32.xlu0 %v1013, 120
      %v1072 = vpop.permute.xlu0 %1071
      %1073 = vrot.lane.b32.xlu0 %v1013, 88
      %v1074 = vpop.permute.xlu0 %1073
      %v1076 = vsel %vm1017, %v1072, 0
      %v1079 = vsel %vm1017, %v1074, 0
      %1081 = vmatpush.bf16.xpose.msra.mxu0 0
      %1082 = vmatpush.bf16.xpose.msra.mxu0 0
      %1083 = vmatpush.bf16.xpose.msra.mxu0 0
      %1084 = vmatpush.bf16.xpose.msra.mxu0 0
      %1085 = vmatpush.bf16.xpose.msra.mxu0 0
      %1086 = vmatpush.bf16.xpose.msra.mxu0 0
      %1087 = vmatpush.bf16.xpose.msra.mxu0 0
      %1088 = vmatpush.bf16.xpose.msra.mxu0 %v1079
      %1089 = vmatmul.bf16.gmra.mxu0 %v1076
      %v1090 = vpop.f32.mrf.mxu0
      %v1091 = vadd.f32 %v935, %v1090
      %v1092 = vpop.f32.mrf.mxu0
      %1093 = vdwg.mxu0
      %v1094 = vsel %vm1017, %v1091, -inf
      %1095 = vmax.xlane.f32.xlu0 %v1094
      %v1096 = vpop.xlane.xlu0 %1095
      %v1097 = vsub.f32 %v1091, %v1096
      %v1098 = vmul.f32 %v1097, 1.442695
      %v1099 = vpow.pop %v1098
      %v1100 = vsel %vm1017, %v1099, 0.0
      %1101 = vadd.xlane.f32.xlu0 %v1100
      %v1102 = vpop.xlane.xlu0 %1101
      %v1103 = vrcp.pop %v1102
      %v1104 = vmul.f32 %v1099, %v1103
      %v1105 = vpack.c.bf16 %v1104, %v1104
      %1106 = vrot.lane.b32.xlu0 %v1013, 56
      %v1107 = vpop.permute.xlu0 %1106
      %v1109 = vsel %vm1017, %v1105, 0
      %v1112 = vsel %vm1054, %v1107, 0
      %1114 = vmatpush.bf16.msra.mxu0 0
      %1115 = vmatpush.bf16.msra.mxu0 0
      %1116 = vmatpush.bf16.msra.mxu0 0
      %1117 = vmatpush.bf16.msra.mxu0 0
      %1118 = vmatpush.bf16.msra.mxu0 0
      %1119 = vmatpush.bf16.msra.mxu0 0
      %1120 = vmatpush.bf16.msra.mxu0 0
      %1121 = vmatpush.bf16.msra.mxu0 %v1112
      %1122 = vmatmul.bf16.gmra.mxu0 %v1109
      %v1123 = vpop.f32.mrf.mxu0
      %v1124 = vadd.f32 0.0, %v1123
      %v1125 = vpop.f32.mrf.mxu0
      %1126 = vdwg.mxu0
      %1127 = vrot.lane.b32.xlu0 %v1013, 112
      %v1128 = vpop.permute.xlu0 %1127
      %1129 = vrot.lane.b32.xlu0 %v1013, 80
      %v1130 = vpop.permute.xlu0 %1129
      %v1132 = vsel %vm1017, %v1128, 0
      %v1135 = vsel %vm1017, %v1130, 0
      %1137 = vmatpush.bf16.xpose.msra.mxu0 0
      %1138 = vmatpush.bf16.xpose.msra.mxu0 0
      %1139 = vmatpush.bf16.xpose.msra.mxu0 0
      %1140 = vmatpush.bf16.xpose.msra.mxu0 0
      %1141 = vmatpush.bf16.xpose.msra.mxu0 0
      %1142 = vmatpush.bf16.xpose.msra.mxu0 0
      %1143 = vmatpush.bf16.xpose.msra.mxu0 0
      %1144 = vmatpush.bf16.xpose.msra.mxu0 %v1135
      %1145 = vmatmul.bf16.gmra.mxu0 %v1132
      %v1146 = vpop.f32.mrf.mxu0
      %v1147 = vadd.f32 %v935, %v1146
      %v1148 = vpop.f32.mrf.mxu0
      %1149 = vdwg.mxu0
      %v1150 = vsel %vm1017, %v1147, -inf
      %1151 = vmax.xlane.f32.xlu0 %v1150
      %v1152 = vpop.xlane.xlu0 %1151
      %v1153 = vsub.f32 %v1147, %v1152
      %v1154 = vmul.f32 %v1153, 1.442695
      %v1155 = vpow.pop %v1154
      %v1156 = vsel %vm1017, %v1155, 0.0
      %1157 = vadd.xlane.f32.xlu0 %v1156
      %v1158 = vpop.xlane.xlu0 %1157
      %v1159 = vrcp.pop %v1158
      %v1160 = vmul.f32 %v1155, %v1159
      %v1161 = vpack.c.bf16 %v1160, %v1160
      %1162 = vrot.lane.b32.xlu0 %v1013, 48
      %v1163 = vpop.permute.xlu0 %1162
      %v1165 = vsel %vm1017, %v1161, 0
      %v1168 = vsel %vm1054, %v1163, 0
      %1170 = vmatpush.bf16.msra.mxu0 0
      %1171 = vmatpush.bf16.msra.mxu0 0
      %1172 = vmatpush.bf16.msra.mxu0 0
      %1173 = vmatpush.bf16.msra.mxu0 0
      %1174 = vmatpush.bf16.msra.mxu0 0
      %1175 = vmatpush.bf16.msra.mxu0 0
      %1176 = vmatpush.bf16.msra.mxu0 0
      %1177 = vmatpush.bf16.msra.mxu0 %v1168
      %1178 = vmatmul.bf16.gmra.mxu0 %v1165
      %v1179 = vpop.f32.mrf.mxu0
      %v1180 = vadd.f32 0.0, %v1179
      %v1181 = vpop.f32.mrf.mxu0
      %1182 = vdwg.mxu0
      %1183 = vrot.lane.b32.xlu0 %v1013, 104
      %v1184 = vpop.permute.xlu0 %1183
      %1185 = vrot.lane.b32.xlu0 %v1013, 72
      %v1186 = vpop.permute.xlu0 %1185
      %v1188 = vsel %vm1017, %v1184, 0
      %v1191 = vsel %vm1017, %v1186, 0
      %1193 = vmatpush.bf16.xpose.msra.mxu0 0
      %1194 = vmatpush.bf16.xpose.msra.mxu0 0
      %1195 = vmatpush.bf16.xpose.msra.mxu0 0
      %1196 = vmatpush.bf16.xpose.msra.mxu0 0
      %1197 = vmatpush.bf16.xpose.msra.mxu0 0
      %1198 = vmatpush.bf16.xpose.msra.mxu0 0
      %1199 = vmatpush.bf16.xpose.msra.mxu0 0
      %1200 = vmatpush.bf16.xpose.msra.mxu0 %v1191
      %1201 = vmatmul.bf16.gmra.mxu0 %v1188
      %v1202 = vpop.f32.mrf.mxu0
      %v1203 = vadd.f32 %v935, %v1202
      %v1204 = vpop.f32.mrf.mxu0
      %1205 = vdwg.mxu0
      %v1206 = vsel %vm1017, %v1203, -inf
      %1207 = vmax.xlane.f32.xlu0 %v1206
      %v1208 = vpop.xlane.xlu0 %1207
      %v1209 = vsub.f32 %v1203, %v1208
      %v1210 = vmul.f32 %v1209, 1.442695
      %v1211 = vpow.pop %v1210
      %v1212 = vsel %vm1017, %v1211, 0.0
      %1213 = vadd.xlane.f32.xlu0 %v1212
      %v1214 = vpop.xlane.xlu0 %1213
      %v1215 = vrcp.pop %v1214
      %v1216 = vmul.f32 %v1211, %v1215
      %v1217 = vpack.c.bf16 %v1216, %v1216
      %1218 = vrot.lane.b32.xlu0 %v1013, 40
      %v1219 = vpop.permute.xlu0 %1218
      %v1221 = vsel %vm1017, %v1217, 0
      %v1224 = vsel %vm1054, %v1219, 0
      %1226 = vmatpush.bf16.msra.mxu0 0
      %1227 = vmatpush.bf16.msra.mxu0 0
      %1228 = vmatpush.bf16.msra.mxu0 0
      %1229 = vmatpush.bf16.msra.mxu0 0
      %1230 = vmatpush.bf16.msra.mxu0 0
      %1231 = vmatpush.bf16.msra.mxu0 0
      %1232 = vmatpush.bf16.msra.mxu0 0
      %1233 = vmatpush.bf16.msra.mxu0 %v1224
      %1234 = vmatmul.bf16.gmra.mxu0 %v1221
      %v1235 = vpop.f32.mrf.mxu0
      %v1236 = vadd.f32 0.0, %v1235
      %v1237 = vpop.f32.mrf.mxu0
      %1238 = vdwg.mxu0
      %1240 = vrot.lane.b32.xlu0 %v1124, 8
      %v1241 = vpop.permute.xlu0 %1240
      %1244 = vrot.lane.b32.xlu0 %v1180, 16
      %v1245 = vpop.permute.xlu0 %1244
      %1248 = vrot.lane.b32.xlu0 %v1236, 24
      %v1249 = vpop.permute.xlu0 %1248
      %v1251 = vsel %vm1017, %v1068, %v1241
      %vm1252 = vcmask 130048
      %v1253 = vsel %vm1252, %v1251, %v1245
      %vm1254 = vcmask 195584
      %v1255 = vsel %vm1254, %v1253, %v1249
      %v1256 = vpack.c.bf16 %v1255, %v1255
      %v1257 = vld [vmem:[%s719] sm:$0xf]
      %v1258 = vld [vmem:[%s719 + $0x4] sm:$0xf]
      %v1259 = vld [vmem:[%s719 + $0x8] sm:$0xf]
      %v1260 = vld [vmem:[%s719 + $0xc] sm:$0xf]
      %v1261 = vld [vmem:[%s722] sm:$0x1]
      %v1263 = vperm.slane %v1261, 0
      %v1269 = vunpack.c.l.b16 %v1257
      %v1270 = vunpack.c.l.b16 %v1258
      %v1271 = vunpack.c.l.b16 %v1259
      %v1272 = vunpack.c.l.b16 %v1260
      %v1273 = vpack.c.b16 %v1270, %v1269
      %v1274 = vpack.c.b16 %v1272, %v1271
      %v1278 = vsel %vm938, %v1256, 0
      %1280 = vmatpush.bf16.msra.mxu0 0
      %1281 = vmatpush.bf16.msra.mxu0 0
      %1282 = vmatpush.bf16.msra.mxu0 0
      %1283 = vmatpush.bf16.msra.mxu0 0
      %1284 = vmatpush.bf16.msra.mxu0 0
      %1285 = vmatpush.bf16.msra.mxu0 0
      %1286 = vmatpush.bf16.msra.mxu0 %v1274
      %1287 = vmatpush.bf16.msra.mxu0 %v1273
      %1288 = vmatmul.bf16.gmra.mxu0 %v1278
      %v1289 = vpop.f32.mrf.mxu0
      %v1290 = vadd.f32 %v1263, %v1289
      %v1291 = vpop.f32.mrf.mxu0
      %1292 = vdwg.mxu0
      %v1293 = vadd.f32 %v934, %v1290
      %v1294 = vld [vmem:[%s725] sm:$0x1]
      %v1295 = vld [vmem:[%s728] sm:$0x1]
      %v1296 = vsel %vm938, %v1293, 0.0
      %1297 = vadd.xlane.f32.xlu0 %v1296
      %v1298 = vpop.xlane.xlu0 %1297
      %v1299 = vmul.f32 %v1298, %v948
      %v1300 = vsub.f32 %v1293, %v1299
      %v1301 = vmul.f32 %v1300, %v1300
      %v1302 = vsel %vm938, %v1301, 0.0
      %1303 = vadd.xlane.f32.xlu0 %v1302
      %v1304 = vpop.xlane.xlu0 %1303
      %v1305 = vmul.f32 %v1304, %v948
      %v1306 = vadd.f32 %v1305, 1e-05
      %v1307 = vrsqrt.pop %v1306
      %v1308 = vmul.f32 %v1307, %v1306
      %v1309 = vmul.f32 %v1308, %v1307
      %v1310 = vmul.f32 0.5, %v1309
      %v1311 = vsub.f32 1.5, %v1310
      %v1312 = vmul.f32 %v1307, %v1311
      %vm1313 = vweird.f32 %v1306
      %vm1314 = vweird.f32 %v1307
      %vm1315 = vmor %vm1313, %vm1314
      %v1316 = vsel %vm1315, %v1307, %v1312
      %v1317 = vmul.f32 %v1300, %v1316
      %v1319 = vperm.slane %v1294, 0
      %v1321 = vmul.f32 %v1317, %v1319
      %v1323 = vperm.slane %v1295, 0
      %v1325 = vadd.f32 %v1321, %v1323
      %v1326 = vpack.c.bf16 %v1325, %v1325
      %v1327 = vld [vmem:[%s733] sm:$0xf]
      %v1328 = vld [vmem:[%s733 + $0x4] sm:$0xf]
      %v1329 = vld [vmem:[%s733 + $0x8] sm:$0xf]
      %v1330 = vld [vmem:[%s733 + $0xc] sm:$0xf]
      %v1331 = vld [vmem:[%s736] sm:$0x1]
      %v1333 = vperm.slane %v1331, 0
      %v1339 = vunpack.c.l.b16 %v1327
      %v1340 = vunpack.c.l.b16 %v1328
      %v1341 = vunpack.c.l.b16 %v1329
      %v1342 = vunpack.c.l.b16 %v1330
      %v1343 = vpack.c.b16 %v1340, %v1339
      %v1344 = vpack.c.b16 %v1342, %v1341
      %v1348 = vsel %vm938, %v1326, 0
      %1350 = vmatpush.bf16.msra.mxu0 0
      %1351 = vmatpush.bf16.msra.mxu0 0
      %1352 = vmatpush.bf16.msra.mxu0 0
      %1353 = vmatpush.bf16.msra.mxu0 0
      %1354 = vmatpush.bf16.msra.mxu0 0
      %1355 = vmatpush.bf16.msra.mxu0 0
      %1356 = vmatpush.bf16.msra.mxu0 %v1344
      %1357 = vmatpush.bf16.msra.mxu0 %v1343
      %1358 = vmatmul.bf16.gmra.mxu0 %v1348
      %v1359 = vpop.f32.mrf.mxu0
      %v1360 = vadd.f32 %v1333, %v1359
      %v1361 = vpop.f32.mrf.mxu0
      %1362 = vdwg.mxu0
      %v1363 = vmax.f32 %v1360, 0.0
      %v1364 = vpack.c.bf16 %v1363, %v1363
      %v1365 = vld [vmem:[%s741] sm:$0xf]
      %v1366 = vld [vmem:[%s741 + $0x4] sm:$0xf]
      %v1367 = vld [vmem:[%s741 + $0x8] sm:$0xf]
      %v1368 = vld [vmem:[%s741 + $0xc] sm:$0xf]
      %v1369 = vld [vmem:[%s741 + $0x10] sm:$0xf]
      %v1370 = vld [vmem:[%s741 + $0x14] sm:$0xf]
      %v1371 = vld [vmem:[%s741 + $0x18] sm:$0xf]
      %v1372 = vld [vmem:[%s741 + $0x1c] sm:$0xf]
      %v1373 = vld [vmem:[%s744] sm:$0x1]
      %v1375 = vperm.slane %v1373, 0
      %v1385 = vunpack.c.l.b16 %v1365
      %v1386 = vunpack.c.l.b16 %v1366
      %v1387 = vunpack.c.l.b16 %v1367
      %v1388 = vunpack.c.l.b16 %v1368
      %v1389 = vunpack.c.l.b16 %v1369
      %v1390 = vunpack.c.l.b16 %v1370
      %v1391 = vunpack.c.l.b16 %v1371
      %v1392 = vunpack.c.l.b16 %v1372
      %v1393 = vpack.c.b16 %v1386, %v1385
      %v1394 = vpack.c.b16 %v1388, %v1387
      %v1395 = vpack.c.b16 %v1390, %v1389
      %v1396 = vpack.c.b16 %v1392, %v1391
      %vm1401 = vcmask 523264
      %v1403 = vsel %vm1401, %v1364, 0
      %1405 = vmatpush.bf16.msra.mxu0 0
      %1406 = vmatpush.bf16.msra.mxu0 0
      %1407 = vmatpush.bf16.msra.mxu0 0
      %1408 = vmatpush.bf16.msra.mxu0 0
      %1409 = vmatpush.bf16.msra.mxu0 %v1396
      %1410 = vmatpush.bf16.msra.mxu0 %v1395
      %1411 = vmatpush.bf16.msra.mxu0 %v1394
      %1412 = vmatpush.bf16.msra.mxu0 %v1393
      %1413 = vmatmul.bf16.gmra.mxu0 %v1403
      %v1414 = vpop.f32.mrf.mxu0
      %v1415 = vadd.f32 %v1375, %v1414
      %v1416 = vpop.f32.mrf.mxu0
      %1417 = vdwg.mxu0
      %v1418 = vadd.f32 %v1293, %v1415
      %1419 = vst.msk [vmem:[#allocation2] sm:$0xff] %vm938, %v1418
      %p1420 = scmp.eq.s32.totalorder %s33, 1
      // Predicated region
      $region93: #{torch_lm_forward.1} parent=87 // pred_check
        %p1421 = pneg %p1420
      $region94: #{torch_lm_forward.1} parent=87 // pred_check_branch
        %1423 = sbr.rel (%p1421) target = $region96
      $region95: #{torch_lm_forward.1} parent=87 // pred_region
        %v1424 = vpack.c.bf16 %v1418, %v1418
        %v1425 = vld [vmem:[%s15] sm:$0xff]
        %v1426 = vld [vmem:[%s15 + $0x8] sm:$0xff]
        %v1427 = vld [vmem:[%s15 + $0x10] sm:$0xff]
        %v1428 = vld [vmem:[%s15 + $0x18] sm:$0xff]
        %v1429 = vld [vmem:[%s16] sm:$0x3]
        %v1431 = vperm.slane %v1429, 0
        %v1432 = vperm.slane %v1429, 1
        %v1439 = vunpack.c.l.b16 %v1425
        %v1440 = vunpack.c.h.b16 %v1425
        %v1441 = vunpack.c.l.b16 %v1426
        %v1442 = vunpack.c.h.b16 %v1426
        %v1443 = vunpack.c.l.b16 %v1427
        %v1444 = vunpack.c.h.b16 %v1427
        %v1445 = vunpack.c.l.b16 %v1428
        %v1446 = vunpack.c.h.b16 %v1428
        %v1447 = vpack.c.b16 %v1441, %v1439
        %v1448 = vpack.c.b16 %v1442, %v1440
        %v1449 = vpack.c.b16 %v1445, %v1443
        %v1450 = vpack.c.b16 %v1446, %v1444
        %v1456 = vsel %vm938, %v1424, 0
        %1458 = vmatpush.bf16.msra.mxu0 0
        %1459 = vmatpush.bf16.msra.mxu0 0
        %1460 = vmatpush.bf16.msra.mxu0 0
        %1461 = vmatpush.bf16.msra.mxu0 0
        %1462 = vmatpush.bf16.msra.mxu0 0
        %1463 = vmatpush.bf16.msra.mxu0 0
        %1464 = vmatpush.bf16.msra.mxu0 %v1449
        %1465 = vmatpush.bf16.msra.mxu0 %v1447
        %1466 = vmatmul.bf16.gmra.mxu0 %v1456
        %v1467 = vpop.f32.mrf.mxu0
        %v1468 = vadd.f32 %v1431, %v1467
        %v1469 = vpop.f32.mrf.mxu0
        %1470 = vdwg.mxu0
        %1471 = vmatpush.bf16.msra.mxu0 0
        %1472 = vmatpush.bf16.msra.mxu0 0
        %1473 = vmatpush.bf16.msra.mxu0 0
        %1474 = vmatpush.bf16.msra.mxu0 0
        %1475 = vmatpush.bf16.msra.mxu0 0
        %1476 = vmatpush.bf16.msra.mxu0 0
        %1477 = vmatpush.bf16.msra.mxu0 %v1450
        %1478 = vmatpush.bf16.msra.mxu0 %v1448
        %1479 = vmatmul.bf16.gmra.mxu0 %v1456
        %v1480 = vpop.f32.mrf.mxu0
        %v1481 = vadd.f32 %v1432, %v1480
        %v1482 = vpop.f32.mrf.mxu0
        %1483 = vdwg.mxu0
        %1484 = vst [vmem:[%s749] sm:$0xff] %v1468
        %1485 = vst [vmem:[%s749 + $0x8] sm:$0xff] %v1481
      $region96: #{torch_lm_forward.1} parent=87 // pred_fallthru
        _
      %s1486 = smul.u32 2, %s32
      %p1487 = scmp.lt.s32.totalorder %s1486, 3
      %s1488 = scalar_select %p1487, %s1486, 3
      %s1489 = smul.addr %s1488, 8
      %s1490 = scalar_lea.vmem %s17, %s1489
      // Predicated region
      $region97: #{torch_lm_forward.1} parent=87 // pred_check
        %p1491 = pneg %p480
      $region98: #{torch_lm_forward.1} parent=87 // pred_check_branch
        %1493 = sbr.rel (%p1491) target = $region100
      $region99: #{torch_lm_forward.1} parent=87 // pred_region
        %s1494 = smul.u32 2, %s32
      $region100: #{torch_lm_forward.1} parent=87 // pred_fallthru
        _
    $region88: #{torch_lm_forward.1} parent=5 // pred_fallthru
      _
    %p1495 = scmp.le.s32.totalorder 2, %s23
    // Predicated region
    $region101: #{torch_lm_forward.1} parent=5 // pred_check
      %p1496 = pneg %p1495
    $region102: #{torch_lm_forward.1} parent=5 // pred_check_branch
      %1498 = sbr.rel (%p1496) target = $region104
    $region103: #{torch_lm_forward.1} parent=5 // pred_region
      %s1499 = ssub.s32 %s23, 2
      // Predicated region
      $region105: #{torch_lm_forward.1} parent=103 // pred_check
        %p1500 = pneg %p486
      $region106: #{torch_lm_forward.1} parent=103 // pred_check_branch
        %1502 = sbr.rel (%p1500) target = $region108
      $region107: #{torch_lm_forward.1} parent=103 // pred_region
        %s1503 = smul.u32 2, %s34
        %p1504 = scmp.lt.s32.totalorder %s1503, 3
        %s1505 = scalar_select %p1504, %s1503, 3
        %s1506 = smul.addr %s1505, 8
        %s1507 = scalar_lea.vmem %s17, %s1506
      $region108: #{torch_lm_forward.1} parent=103 // pred_fallthru
        _
    $region104: #{torch_lm_forward.1} parent=5 // pred_fallthru
      _
  $region6: #{torch_lm_forward.1} parent=0 // loop_footer
    %s27 = sadd.s32 1, %s23
  $region7: #{torch_lm_forward.1} parent=0 // loop_footer_branch
    %22 = sbr.rel target = $region3
  $region8: #{torch_lm_forward.1} parent=0 // loop_exit
    _

</llo_original>
